<compile_context>
chip_gen: v7x
topology: tpu7x:2x2x1
jax: 0.10.0
libtpu: 0.0.40
codegen_flags: <defaults>
</compile_context>

<pallas_src>
import functools

import jax
import jax.numpy as jnp
from jax.experimental import pallas as pl
from jax.experimental.pallas import tpu as pltpu

EPS = 1e-5  # nn.BatchNorm1d default eps


def tc_encoder_kernel(x_ref, wqkv_ref, w1_ref, b1_ref, w2_ref, b2_ref,
                      sb_ref, sel_ref, o_ref, *, tb):
    x = x_ref[...]                                   # (M, D) f32, rows = (f, t)
    M, D = x_ref.shape
    Dh = D // 2
    feat = M // tb

    # ---------------- fused QKV projection -----------------------------------
    # Wq pre-scaled by 1/sqrt(D); Wo pre-folded into the V slice (diag(1/denom)
    # left-scale commutes with the right-multiply by Wo, so this is exact).
    qkv = jnp.dot(x, wqkv_ref[...], preferred_element_type=jnp.float32)  # (M, 3D)
    q = qkv[:, :D]
    k = qkv[:, D:2 * D]
    vo = qkv[:, 2 * D:]

    # ---------------- per-batch self-attention over the F axis ---------------
    # Rows are feature-major: row r belongs to batch-in-tile (r % tb).  Build
    # the 0/1 same-batch mask in-kernel from two iota compares (no (M,M) DMA).
    rg = jax.lax.broadcasted_iota(jnp.int32, (M, 1), 0) % tb
    cg = jax.lax.broadcasted_iota(jnp.int32, (1, M), 1) % tb
    mask = rg == cg                                                       # (M, M)

    s = jax.lax.dot_general(q, k, (((1,), (1,)), ((), ())),
                            preferred_element_type=jnp.float32)          # (M, M)
    s = jnp.where(mask, s, -1e30)                    # masked max: exact & stable
    s = s - jnp.max(s, axis=-1, keepdims=True)
    p = jnp.exp(s)                                   # masked entries underflow to 0
    denom = jnp.sum(p, axis=-1, keepdims=True)
    attn = jnp.dot(p, vo, preferred_element_type=jnp.float32)            # (M, D)
    attn = attn * pl.reciprocal(denom, approx=True)
    x = attn + x
    # nn.Dropout is a no-op in eval mode; intentionally skipped.

    # ---------------- BatchNorm1d (eval) as pre-folded scale/bias ------------
    scale = sb_ref[:, 0:1]                           # (M, 1) per feature channel
    bias = sb_ref[:, 1:2]
    x = x * scale + bias

    # ---------------- feedforward (D -> 4D -> D) + residual ------------------
    h = jnp.dot(x, w1_ref[...], preferred_element_type=jnp.float32) + b1_ref[...]
    h = jnp.maximum(h, 0.0)
    x = jnp.dot(h, w2_ref[...], preferred_element_type=jnp.float32) + b2_ref[...] + x

    # ---------------- second BN + ReLU ---------------------------------------
    x = jnp.maximum(x * scale + bias, 0.0)

    # ---------------- MaxPool1d(kernel=2, stride=2) along D ------------------
    # One fused 0/1 selector matmul -> [even | odd], then max the lane halves.
    eo = jnp.dot(x, sel_ref[...], preferred_element_type=jnp.float32)    # (M, 2*Dh)
    pooled = jnp.maximum(eo[:, :Dh], eo[:, Dh:])                         # (M, Dh)

    # ---------------- lane-dense output repack --------------------------------
    # Out block = (tb, F*Dh): row = batch-in-tile, lanes = feature-major pooled
    # channels.  Feature-major row ordering makes every slice static.
    for f in range(feat):
        o_ref[:, f * Dh:(f + 1) * Dh] = pooled[f * tb:(f + 1) * tb, :]


def _pick_tb(B, F):
    """~128 MXU rows per grid step, tb a multiple of 8 (lane-dense out block),
    and at least 2 grid steps so both v7x TensorCores / megacore get work."""
    tb = max(8, ((128 // max(F, 1)) // 8) * 8)
    while tb > 8 and (B + tb - 1) // tb < 2:
        tb -= 8
    return tb


def tc_encoder_layer(x, params, tb=None):
    B, F, D = x.shape
    assert D % 2 == 0
    Dh = D // 2

    if tb is None:
        tb = _pick_tb(B, F)
    Bp = ((B + tb - 1) // tb) * tb               # pad batch to a multiple of tb
    nb = Bp // tb
    M = tb * F

    xp = jnp.pad(x, ((0, Bp - B), (0, 0), (0, 0))) if Bp != B else x
    # Rows inside each tile ordered feature-major (f, t): row = f*tb + t.
    x2 = xp.reshape(nb, tb, F, D).transpose(0, 2, 1, 3).reshape(nb * M, D)

    # ------- host-side constant folding (outside the per-step kernel body) ---
    hp = jax.lax.Precision.HIGHEST
    wvo = jnp.dot(params["wv"], params["wo"], precision=hp)                # (D, D)
    wqkv = jnp.concatenate(
        [params["wq"] * (D ** -0.5), params["wk"], wvo], axis=1)           # (D, 3D)
    bn_scale = params["gamma"] * jax.lax.rsqrt(params["var"] + EPS)        # (F, 1)
    bn_bias = params["beta"] - params["mean"] * bn_scale                   # (F, 1)
    sb = jnp.concatenate([jnp.repeat(bn_scale, tb, axis=0),
                          jnp.repeat(bn_bias, tb, axis=0)], axis=1)        # (M, 2)
    r = jnp.arange(D, dtype=jnp.int32)[:, None]
    c = jnp.arange(Dh, dtype=jnp.int32)[None, :]
    sel = jnp.concatenate([(r == 2 * c).astype(jnp.float32),
                           (r == 2 * c + 1).astype(jnp.float32)], axis=1)  # (D, 2Dh)

    def const(shape):
        return pl.BlockSpec(shape, lambda b, _n=len(shape): (0,) * _n)

    kernel = functools.partial(tc_encoder_kernel, tb=tb)

    out2 = pl.pallas_call(
        kernel,
        out_shape=jax.ShapeDtypeStruct((Bp, F * Dh), jnp.float32),
        grid_spec=pltpu.PrefetchScalarGridSpec(
            num_scalar_prefetch=0,
            grid=(nb,),
            in_specs=[
                pl.BlockSpec((M, D), lambda b: (b, 0)),       # x tile (tb batches)
                const((D, 3 * D)),                            # fused Wq|Wk|Wv@Wo
                const((D, 4 * D)), const((1, 4 * D)),         # W1, b1
                const((4 * D, D)), const((1, D)),             # W2, b2
                const((M, 2)),                                # BN [scale | bias]
                const((D, 2 * Dh)),                           # fused pool selector
            ],
            out_specs=pl.BlockSpec((tb, F * Dh), lambda b: (b, 0)),  # lane-dense
        ),
        compiler_params=pltpu.CompilerParams(
            dimension_semantics=("parallel",)),
    )(x2, wqkv, params["w1"], params["b1"], params["w2"], params["b2"], sb, sel)

    return out2.reshape(Bp, F, Dh)[:B]


def reference(x, p):
    """Pure-JAX reference of the same forward pass at HIGHEST matmul precision
    (XLA's default TPU matmul precision is bf16, which is why the previous
    comparison drifted to ~2.7e-3)."""
    hp = jax.lax.Precision.HIGHEST
    B, F, D = x.shape
    q = jnp.einsum("bfd,de->bfe", x, p["wq"], precision=hp)
    k = jnp.einsum("bfd,de->bfe", x, p["wk"], precision=hp)
    v = jnp.einsum("bfd,de->bfe", x, p["wv"], precision=hp)
    s = jnp.einsum("bfd,bgd->bfg", q, k, precision=hp) * (D ** -0.5)
    a = jax.nn.softmax(s, axis=-1)
    attn = jnp.einsum("bfg,bgd->bfd", a, v, precision=hp)
    attn = jnp.einsum("bfd,de->bfe", attn, p["wo"], precision=hp)
    x = attn + x

    def bn(z):
        return ((z - p["mean"][None]) * jax.lax.rsqrt(p["var"][None] + EPS)
                * p["gamma"][None] + p["beta"][None])

    x = bn(x)
    h = jnp.maximum(jnp.einsum("bfd,dh->bfh", x, p["w1"], precision=hp) + p["b1"], 0.0)
    x = jnp.einsum("bfh,hd->bfd", h, p["w2"], precision=hp) + p["b2"] + x
    x = jnp.maximum(bn(x), 0.0)
    return jnp.maximum(x[..., 0::2], x[..., 1::2])


if __name__ == "__main__":
    B = 32                                   # tb=16 -> M=128, grid=(2,), no padding
    d_model = 32
    number_feature_num, category_feature_num = 5, 3
    F = number_feature_num + category_feature_num

    key = jax.random.PRNGKey(0)
    ks = jax.random.split(key, 16)
    sc = 0.1
    params = {
        "wq": jax.random.normal(ks[0], (d_model, d_model), jnp.float32) * sc,
        "wk": jax.random.normal(ks[1], (d_model, d_model), jnp.float32) * sc,
        "wv": jax.random.normal(ks[2], (d_model, d_model), jnp.float32) * sc,
        "wo": jax.random.normal(ks[3], (d_model, d_model), jnp.float32) * sc,
        "w1": jax.random.normal(ks[4], (d_model, 4 * d_model), jnp.float32) * sc,
        "b1": jax.random.normal(ks[5], (1, 4 * d_model), jnp.float32) * sc,
        "w2": jax.random.normal(ks[6], (4 * d_model, d_model), jnp.float32) * sc,
        "b2": jax.random.normal(ks[7], (1, d_model), jnp.float32) * sc,
        "gamma": 1.0 + jax.random.normal(ks[8], (F, 1), jnp.float32) * sc,
        "beta": jax.random.normal(ks[9], (F, 1), jnp.float32) * sc,
        "mean": jax.random.normal(ks[10], (F, 1), jnp.float32) * sc,
        "var": jax.random.uniform(ks[11], (F, 1), jnp.float32, 0.5, 1.5),
    }
    x = jax.random.normal(ks[12], (B, F, d_model), jnp.float32)

    out = jax.block_until_ready(tc_encoder_layer(x, params))
    ref = reference(x, params)

    assert out.shape == (B, F, d_model // 2), out.shape
    # Tolerance sized for TPU MXU precision: kernel math is f32, but any
    # bf16-operand matmul path (XLA/TPU default precision) stays well inside.
    assert jnp.allclose(out, ref, atol=5e-3, rtol=5e-3), float(
        jnp.max(jnp.abs(out - ref)))
    print("KERNEL_OK")
</pallas_src>

<mosaic_0001>
module attributes {stable_mosaic.version = 11 : i64} {
  func.func @tc_encoder_kernel(%arg0: i32, %arg1: memref<128x32xf32, #tpu.memory_space<vmem>>, %arg2: memref<32x96xf32, #tpu.memory_space<vmem>>, %arg3: memref<32x128xf32, #tpu.memory_space<vmem>>, %arg4: memref<1x128xf32, #tpu.memory_space<vmem>>, %arg5: memref<128x32xf32, #tpu.memory_space<vmem>>, %arg6: memref<1x32xf32, #tpu.memory_space<vmem>>, %arg7: memref<128x2xf32, #tpu.memory_space<vmem>>, %arg8: memref<32x32xf32, #tpu.memory_space<vmem>>, %arg9: memref<16x128xf32, #tpu.memory_space<vmem>>) attributes {dimension_semantics = [#tpu.dimension_semantics<parallel>], iteration_bounds = array<i64: 2>, scalar_prefetch = 0 : i64, scratch_operands = 0 : i64, tpu.core_type = #tpu.core_type<tc>, window_params = [{transform_indices = @transform_0, window_bounds = array<i64: 128, 32>}, {pipeline_mode = #tpu.pipeline_mode<synchronous>, transform_indices = @transform_1, window_bounds = array<i64: 32, 96>}, {pipeline_mode = #tpu.pipeline_mode<synchronous>, transform_indices = @transform_2, window_bounds = array<i64: 32, 128>}, {pipeline_mode = #tpu.pipeline_mode<synchronous>, transform_indices = @transform_3, window_bounds = array<i64: 1, 128>}, {pipeline_mode = #tpu.pipeline_mode<synchronous>, transform_indices = @transform_4, window_bounds = array<i64: 128, 32>}, {pipeline_mode = #tpu.pipeline_mode<synchronous>, transform_indices = @transform_5, window_bounds = array<i64: 1, 32>}, {pipeline_mode = #tpu.pipeline_mode<synchronous>, transform_indices = @transform_6, window_bounds = array<i64: 128, 2>}, {pipeline_mode = #tpu.pipeline_mode<synchronous>, transform_indices = @transform_7, window_bounds = array<i64: 32, 32>}, {transform_indices = @transform_8, window_bounds = array<i64: 16, 128>}]} {
    %c0 = arith.constant 0 : index
    %c0_0 = arith.constant 0 : index
    %0 = vector.load %arg1[%c0, %c0_0] : memref<128x32xf32, #tpu.memory_space<vmem>>, vector<128x32xf32>
    %c0_1 = arith.constant 0 : index
    %c0_2 = arith.constant 0 : index
    %1 = vector.load %arg2[%c0_1, %c0_2] : memref<32x96xf32, #tpu.memory_space<vmem>>, vector<32x96xf32>
    %cst = arith.constant dense<0.000000e+00> : vector<128x96xf32>
    %2 = tpu.matmul %0, %1, %cst {dimension_numbers = #tpu.dot_dimension_numbers<[1], [0], [0], [1], [0, 0, 1, 1], [], []>} : vector<128x32xf32>, vector<32x96xf32>, vector<128x96xf32> -> vector<128x96xf32>
    %3 = vector.extract_strided_slice %2 {offsets = [0, 0], sizes = [128, 32], strides = [1, 1]} : vector<128x96xf32> to vector<128x32xf32>
    %4 = vector.extract_strided_slice %2 {offsets = [0, 32], sizes = [128, 32], strides = [1, 1]} : vector<128x96xf32> to vector<128x32xf32>
    %5 = vector.extract_strided_slice %2 {offsets = [0, 64], sizes = [128, 32], strides = [1, 1]} : vector<128x96xf32> to vector<128x32xf32>
    %6 = tpu.iota {dimensions = array<i32: 0>} : vector<128x1xi32>
    %c16_i32 = arith.constant 16 : i32
    %c0_i32 = arith.constant 0 : i32
    %7 = arith.cmpi eq, %c16_i32, %c0_i32 : i32
    %c1_i32 = arith.constant 1 : i32
    %8 = arith.select %7, %c1_i32, %c16_i32 : i32
    %9 = vector.broadcast %8 : i32 to vector<128x1xi32>
    %10 = arith.remsi %6, %9 : vector<128x1xi32>
    %c0_i32_3 = arith.constant 0 : i32
    %11 = vector.broadcast %c0_i32_3 : i32 to vector<128x1xi32>
    %12 = arith.cmpi ne, %10, %11 : vector<128x1xi32>
    %c0_i32_4 = arith.constant 0 : i32
    %13 = vector.broadcast %c0_i32_4 : i32 to vector<128x1xi32>
    %14 = arith.cmpi slt, %10, %13 : vector<128x1xi32>
    %c0_i32_5 = arith.constant 0 : i32
    %15 = arith.cmpi slt, %8, %c0_i32_5 : i32
    %16 = vector.broadcast %15 : i1 to vector<128x1xi1>
    %17 = vector.broadcast %16 : vector<128x1xi1> to vector<128x1xi1>
    %18 = arith.xori %14, %17 : vector<128x1xi1>
    %19 = arith.andi %18, %12 : vector<128x1xi1>
    %20 = vector.broadcast %8 : i32 to vector<128x1xi32>
    %21 = arith.addi %10, %20 : vector<128x1xi32>
    %22 = arith.select %19, %21, %10 : vector<128x1xi1>, vector<128x1xi32>
    %23 = tpu.iota {dimensions = array<i32: 1>} : vector<1x128xi32>
    %c16_i32_6 = arith.constant 16 : i32
    %c0_i32_7 = arith.constant 0 : i32
    %24 = arith.cmpi eq, %c16_i32_6, %c0_i32_7 : i32
    %c1_i32_8 = arith.constant 1 : i32
    %25 = arith.select %24, %c1_i32_8, %c16_i32_6 : i32
    %26 = vector.broadcast %25 : i32 to vector<1x128xi32>
    %27 = arith.remsi %23, %26 : vector<1x128xi32>
    %c0_i32_9 = arith.constant 0 : i32
    %28 = vector.broadcast %c0_i32_9 : i32 to vector<1x128xi32>
    %29 = arith.cmpi ne, %27, %28 : vector<1x128xi32>
    %c0_i32_10 = arith.constant 0 : i32
    %30 = vector.broadcast %c0_i32_10 : i32 to vector<1x128xi32>
    %31 = arith.cmpi slt, %27, %30 : vector<1x128xi32>
    %c0_i32_11 = arith.constant 0 : i32
    %32 = arith.cmpi slt, %25, %c0_i32_11 : i32
    %33 = vector.broadcast %32 : i1 to vector<1x128xi1>
    %34 = vector.broadcast %33 : vector<1x128xi1> to vector<1x128xi1>
    %35 = arith.xori %31, %34 : vector<1x128xi1>
    %36 = arith.andi %35, %29 : vector<1x128xi1>
    %37 = vector.broadcast %25 : i32 to vector<1x128xi32>
    %38 = arith.addi %27, %37 : vector<1x128xi32>
    %39 = arith.select %36, %38, %27 : vector<1x128xi1>, vector<1x128xi32>
    %40 = vector.broadcast %22 : vector<128x1xi32> to vector<128x128xi32>
    %41 = vector.broadcast %39 : vector<1x128xi32> to vector<128x128xi32>
    %42 = arith.cmpi eq, %40, %41 : vector<128x128xi32>
    %cst_12 = arith.constant dense<0.000000e+00> : vector<128x128xf32>
    %43 = tpu.matmul %3, %4, %cst_12 {dimension_numbers = #tpu.dot_dimension_numbers<[1], [1], [0], [0], [0, 0, 1, 0], [], []>} : vector<128x32xf32>, vector<128x32xf32>, vector<128x128xf32> -> vector<128x128xf32>
    %cst_13 = arith.constant -1.000000e+30 : f32
    %44 = vector.broadcast %cst_13 : f32 to vector<128x128xf32>
    %45 = arith.select %42, %43, %44 : vector<128x128xi1>, vector<128x128xf32>
    %cst_14 = arith.constant dense<0xFF800000> : vector<128xf32>
    %46 = vector.multi_reduction <maximumf>, %45, %cst_14 [1] : vector<128x128xf32> to vector<128xf32>
    %47 = vector.shape_cast %46 : vector<128xf32> to vector<128x1xf32>
    %48 = vector.broadcast %47 : vector<128x1xf32> to vector<128x128xf32>
    %49 = arith.subf %45, %48 : vector<128x128xf32>
    %50 = math.exp %49 : vector<128x128xf32>
    %cst_15 = arith.constant dense<0.000000e+00> : vector<128xf32>
    %51 = vector.multi_reduction <add>, %50, %cst_15 [1] : vector<128x128xf32> to vector<128xf32>
    %52 = vector.shape_cast %51 : vector<128xf32> to vector<128x1xf32>
    %cst_16 = arith.constant dense<0.000000e+00> : vector<128x32xf32>
    %53 = tpu.matmul %50, %5, %cst_16 {dimension_numbers = #tpu.dot_dimension_numbers<[1], [0], [0], [1], [0, 0, 1, 1], [], []>} : vector<128x128xf32>, vector<128x32xf32>, vector<128x32xf32> -> vector<128x32xf32>
    %54 = tpu.reciprocal %52 {approx = true} : vector<128x1xf32> -> vector<128x1xf32>
    %55 = vector.broadcast %54 : vector<128x1xf32> to vector<128x32xf32>
    %56 = arith.mulf %53, %55 : vector<128x32xf32>
    %57 = arith.addf %56, %0 : vector<128x32xf32>
    %c0_17 = arith.constant 0 : index
    %c0_18 = arith.constant 0 : index
    %58 = vector.load %arg7[%c0_17, %c0_18] : memref<128x2xf32, #tpu.memory_space<vmem>>, vector<128x1xf32>
    %c0_19 = arith.constant 0 : index
    %c1 = arith.constant 1 : index
    %59 = vector.load %arg7[%c0_19, %c1] : memref<128x2xf32, #tpu.memory_space<vmem>>, vector<128x1xf32>
    %60 = vector.broadcast %58 : vector<128x1xf32> to vector<128x32xf32>
    %61 = arith.mulf %57, %60 : vector<128x32xf32>
    %62 = vector.broadcast %59 : vector<128x1xf32> to vector<128x32xf32>
    %63 = arith.addf %61, %62 : vector<128x32xf32>
    %c0_20 = arith.constant 0 : index
    %c0_21 = arith.constant 0 : index
    %64 = vector.load %arg3[%c0_20, %c0_21] : memref<32x128xf32, #tpu.memory_space<vmem>>, vector<32x128xf32>
    %cst_22 = arith.constant dense<0.000000e+00> : vector<128x128xf32>
    %65 = tpu.matmul %63, %64, %cst_22 {dimension_numbers = #tpu.dot_dimension_numbers<[1], [0], [0], [1], [0, 0, 1, 1], [], []>} : vector<128x32xf32>, vector<32x128xf32>, vector<128x128xf32> -> vector<128x128xf32>
    %c0_23 = arith.constant 0 : index
    %c0_24 = arith.constant 0 : index
    %66 = vector.load %arg4[%c0_23, %c0_24] : memref<1x128xf32, #tpu.memory_space<vmem>>, vector<1x128xf32>
    %67 = vector.broadcast %66 : vector<1x128xf32> to vector<128x128xf32>
    %68 = arith.addf %65, %67 : vector<128x128xf32>
    %cst_25 = arith.constant 0.000000e+00 : f32
    %69 = vector.broadcast %cst_25 : f32 to vector<128x128xf32>
    %70 = arith.maximumf %68, %69 : vector<128x128xf32>
    %c0_26 = arith.constant 0 : index
    %c0_27 = arith.constant 0 : index
    %71 = vector.load %arg5[%c0_26, %c0_27] : memref<128x32xf32, #tpu.memory_space<vmem>>, vector<128x32xf32>
    %cst_28 = arith.constant dense<0.000000e+00> : vector<128x32xf32>
    %72 = tpu.matmul %70, %71, %cst_28 {dimension_numbers = #tpu.dot_dimension_numbers<[1], [0], [0], [1], [0, 0, 1, 1], [], []>} : vector<128x128xf32>, vector<128x32xf32>, vector<128x32xf32> -> vector<128x32xf32>
    %c0_29 = arith.constant 0 : index
    %c0_30 = arith.constant 0 : index
    %73 = vector.load %arg6[%c0_29, %c0_30] : memref<1x32xf32, #tpu.memory_space<vmem>>, vector<1x32xf32>
    %74 = vector.broadcast %73 : vector<1x32xf32> to vector<128x32xf32>
    %75 = arith.addf %72, %74 : vector<128x32xf32>
    %76 = arith.addf %75, %63 : vector<128x32xf32>
    %77 = vector.broadcast %58 : vector<128x1xf32> to vector<128x32xf32>
    %78 = arith.mulf %76, %77 : vector<128x32xf32>
    %79 = vector.broadcast %59 : vector<128x1xf32> to vector<128x32xf32>
    %80 = arith.addf %78, %79 : vector<128x32xf32>
    %cst_31 = arith.constant 0.000000e+00 : f32
    %81 = vector.broadcast %cst_31 : f32 to vector<128x32xf32>
    %82 = arith.maximumf %80, %81 : vector<128x32xf32>
    %c0_32 = arith.constant 0 : index
    %c0_33 = arith.constant 0 : index
    %83 = vector.load %arg8[%c0_32, %c0_33] : memref<32x32xf32, #tpu.memory_space<vmem>>, vector<32x32xf32>
    %cst_34 = arith.constant dense<0.000000e+00> : vector<128x32xf32>
    %84 = tpu.matmul %82, %83, %cst_34 {dimension_numbers = #tpu.dot_dimension_numbers<[1], [0], [0], [1], [0, 0, 1, 1], [], []>} : vector<128x32xf32>, vector<32x32xf32>, vector<128x32xf32> -> vector<128x32xf32>
    %85 = vector.extract_strided_slice %84 {offsets = [0, 0], sizes = [128, 16], strides = [1, 1]} : vector<128x32xf32> to vector<128x16xf32>
    %86 = vector.extract_strided_slice %84 {offsets = [0, 16], sizes = [128, 16], strides = [1, 1]} : vector<128x32xf32> to vector<128x16xf32>
    %87 = arith.maximumf %85, %86 : vector<128x16xf32>
    %88 = vector.extract_strided_slice %87 {offsets = [0, 0], sizes = [16, 16], strides = [1, 1]} : vector<128x16xf32> to vector<16x16xf32>
    %c0_35 = arith.constant 0 : index
    %c0_36 = arith.constant 0 : index
    %89 = vector.load %arg9[%c0_35, %c0_36] : memref<16x128xf32, #tpu.memory_space<vmem>>, vector<16x16xf32>
    tpu.vector_store %arg9[%c0_35, %c0_36], %88 {strides = array<i32>} : memref<16x128xf32, #tpu.memory_space<vmem>>, vector<16x16xf32>,
    %90 = vector.extract_strided_slice %87 {offsets = [16, 0], sizes = [16, 16], strides = [1, 1]} : vector<128x16xf32> to vector<16x16xf32>
    %c0_37 = arith.constant 0 : index
    %c16 = arith.constant 16 : index
    %91 = vector.load %arg9[%c0_37, %c16] : memref<16x128xf32, #tpu.memory_space<vmem>>, vector<16x16xf32>
    tpu.vector_store %arg9[%c0_37, %c16], %90 {strides = array<i32>} : memref<16x128xf32, #tpu.memory_space<vmem>>, vector<16x16xf32>,
    %92 = vector.extract_strided_slice %87 {offsets = [32, 0], sizes = [16, 16], strides = [1, 1]} : vector<128x16xf32> to vector<16x16xf32>
    %c0_38 = arith.constant 0 : index
    %c32 = arith.constant 32 : index
    %93 = vector.load %arg9[%c0_38, %c32] : memref<16x128xf32, #tpu.memory_space<vmem>>, vector<16x16xf32>
    tpu.vector_store %arg9[%c0_38, %c32], %92 {strides = array<i32>} : memref<16x128xf32, #tpu.memory_space<vmem>>, vector<16x16xf32>,
    %94 = vector.extract_strided_slice %87 {offsets = [48, 0], sizes = [16, 16], strides = [1, 1]} : vector<128x16xf32> to vector<16x16xf32>
    %c0_39 = arith.constant 0 : index
    %c48 = arith.constant 48 : index
    %95 = vector.load %arg9[%c0_39, %c48] : memref<16x128xf32, #tpu.memory_space<vmem>>, vector<16x16xf32>
    tpu.vector_store %arg9[%c0_39, %c48], %94 {strides = array<i32>} : memref<16x128xf32, #tpu.memory_space<vmem>>, vector<16x16xf32>,
    %96 = vector.extract_strided_slice %87 {offsets = [64, 0], sizes = [16, 16], strides = [1, 1]} : vector<128x16xf32> to vector<16x16xf32>
    %c0_40 = arith.constant 0 : index
    %c64 = arith.constant 64 : index
    %97 = vector.load %arg9[%c0_40, %c64] : memref<16x128xf32, #tpu.memory_space<vmem>>, vector<16x16xf32>
    tpu.vector_store %arg9[%c0_40, %c64], %96 {strides = array<i32>} : memref<16x128xf32, #tpu.memory_space<vmem>>, vector<16x16xf32>,
    %98 = vector.extract_strided_slice %87 {offsets = [80, 0], sizes = [16, 16], strides = [1, 1]} : vector<128x16xf32> to vector<16x16xf32>
    %c0_41 = arith.constant 0 : index
    %c80 = arith.constant 80 : index
    %99 = vector.load %arg9[%c0_41, %c80] : memref<16x128xf32, #tpu.memory_space<vmem>>, vector<16x16xf32>
    tpu.vector_store %arg9[%c0_41, %c80], %98 {strides = array<i32>} : memref<16x128xf32, #tpu.memory_space<vmem>>, vector<16x16xf32>,
    %100 = vector.extract_strided_slice %87 {offsets = [96, 0], sizes = [16, 16], strides = [1, 1]} : vector<128x16xf32> to vector<16x16xf32>
    %c0_42 = arith.constant 0 : index
    %c96 = arith.constant 96 : index
    %101 = vector.load %arg9[%c0_42, %c96] : memref<16x128xf32, #tpu.memory_space<vmem>>, vector<16x16xf32>
    tpu.vector_store %arg9[%c0_42, %c96], %100 {strides = array<i32>} : memref<16x128xf32, #tpu.memory_space<vmem>>, vector<16x16xf32>,
    %102 = vector.extract_strided_slice %87 {offsets = [112, 0], sizes = [16, 16], strides = [1, 1]} : vector<128x16xf32> to vector<16x16xf32>
    %c0_43 = arith.constant 0 : index
    %c112 = arith.constant 112 : index
    %103 = vector.load %arg9[%c0_43, %c112] : memref<16x128xf32, #tpu.memory_space<vmem>>, vector<16x16xf32>
    tpu.vector_store %arg9[%c0_43, %c112], %102 {strides = array<i32>} : memref<16x128xf32, #tpu.memory_space<vmem>>, vector<16x16xf32>,
    return
  }
  func.func @transform_0(%arg0: i32) -> (i32, i32) {
    %c0_i32 = arith.constant 0 : i32
    %c0_i32_0 = arith.constant 0 : i32
    return %arg0, %c0_i32 : i32, i32
  }
  func.func @transform_1(%arg0: i32) -> (i32, i32) {
    %c0_i32 = arith.constant 0 : i32
    %c0_i32_0 = arith.constant 0 : i32
    %c0_i32_1 = arith.constant 0 : i32
    return %c0_i32, %c0_i32_0 : i32, i32
  }
  func.func @transform_2(%arg0: i32) -> (i32, i32) {
    %c0_i32 = arith.constant 0 : i32
    %c0_i32_0 = arith.constant 0 : i32
    %c0_i32_1 = arith.constant 0 : i32
    return %c0_i32, %c0_i32_0 : i32, i32
  }
  func.func @transform_3(%arg0: i32) -> (i32, i32) {
    %c0_i32 = arith.constant 0 : i32
    %c0_i32_0 = arith.constant 0 : i32
    %c0_i32_1 = arith.constant 0 : i32
    return %c0_i32, %c0_i32_0 : i32, i32
  }
  func.func @transform_4(%arg0: i32) -> (i32, i32) {
    %c0_i32 = arith.constant 0 : i32
    %c0_i32_0 = arith.constant 0 : i32
    %c0_i32_1 = arith.constant 0 : i32
    return %c0_i32, %c0_i32_0 : i32, i32
  }
  func.func @transform_5(%arg0: i32) -> (i32, i32) {
    %c0_i32 = arith.constant 0 : i32
    %c0_i32_0 = arith.constant 0 : i32
    %c0_i32_1 = arith.constant 0 : i32
    return %c0_i32, %c0_i32_0 : i32, i32
  }
  func.func @transform_6(%arg0: i32) -> (i32, i32) {
    %c0_i32 = arith.constant 0 : i32
    %c0_i32_0 = arith.constant 0 : i32
    %c0_i32_1 = arith.constant 0 : i32
    return %c0_i32, %c0_i32_0 : i32, i32
  }
  func.func @transform_7(%arg0: i32) -> (i32, i32) {
    %c0_i32 = arith.constant 0 : i32
    %c0_i32_0 = arith.constant 0 : i32
    %c0_i32_1 = arith.constant 0 : i32
    return %c0_i32, %c0_i32_0 : i32, i32
  }
  func.func @transform_8(%arg0: i32) -> (i32, i32) {
    %c0_i32 = arith.constant 0 : i32
    %c0_i32_0 = arith.constant 0 : i32
    return %arg0, %c0_i32 : i32, i32
  }
}

</mosaic_0001>

<llo_original>
// kernel: tpu_custom_call.1
$region0: #{tpu_custom_call.1}
  #allocation0 [shape = 'u32[]', space=smem, size = 0x4, offset = 0x4, fixed_abs, tag = 'smem constant byte address 0x4 - core index']
  #allocation1 [shape = 'u32[144,128]{1,0:T(1,128)}', space=vmem, size = 0x12000, scoped, tag = 'internal scratch']
  %s0 = inlined_call_operand.vmem [shape: f32[256,32], index: 0, kind: input, shape index: {}]
  %s1 = inlined_call_operand.vmem [shape: f32[32,96], index: 1, kind: input, shape index: {}]
  %s2 = inlined_call_operand.vmem [shape: f32[32,128], index: 2, kind: input, shape index: {}]
  %s3 = inlined_call_operand.vmem [shape: f32[1,128], index: 3, kind: input, shape index: {}]
  %s4 = inlined_call_operand.vmem [shape: f32[128,32], index: 4, kind: input, shape index: {}]
  %s5 = inlined_call_operand.vmem [shape: f32[1,32], index: 5, kind: input, shape index: {}]
  %s6 = inlined_call_operand.vmem [shape: f32[128,2], index: 6, kind: input, shape index: {}]
  %s7 = inlined_call_operand.vmem [shape: f32[32,32], index: 7, kind: input, shape index: {}]
  %s8 = inlined_call_operand.hbm [shape: f32[32,128], index: 8, kind: output, shape index: {}]
  %s9 = sld [smem:[#allocation0]]
  $region65: #{tpu_custom_call.1} parent=0
    _
  %s11 = ssub.s32 1, %s9
  %s12 = scalar_select 0, %s11, %s9
  $region1: #{tpu_custom_call.1} parent=0
    #allocation2 [shape = 'u8[16384]{0}', space=vmem, size = 0x4000, scoped, tag = 'output window, operand 0']
    #allocation3 [shape = 's32[2]{0}', space=sflag, size = 0x8, scoped, tag = 'scoped memory for tpu_custom_call.1']
    %13 = vsyncpa [#allocation3], 0
    %s14 = scalar_lea.sflag [#allocation3], 1
    %15 = vsyncpa %s14, 0
    loop: start=0, step=1, limit=4
    $region2: #{tpu_custom_call.1} parent=1 // loop_pre_header
      _
    $region3: #{tpu_custom_call.1} parent=1 // loop_header
      %s17 = sphi 0, %s21
      %p18 = scmp.ge.s32.totalorder %s17, 4
      %s27 = sphi 0, %s29
      %s30 = sphi 0, %s27
      %s31 = sphi 0, %s30
      %s47 = sphi 0, %s31
      %s51 = sphi 0, %s51
      %s53 = sphi 0, %s51
      %s54 = sphi 0, %s53
      %s68 = sphi 0, %s54
      %s72 = sphi 0, %s72
      %s74 = sphi 0, %s72
      %s75 = sphi 0, %s74
      %s89 = sphi 0, %s75
      %s93 = sphi 0, %s93
      %s95 = sphi 0, %s93
      %s96 = sphi 0, %s95
      %s110 = sphi 0, %s96
      %s114 = sphi 0, %s114
      %s116 = sphi 0, %s114
      %s117 = sphi 0, %s116
      %s131 = sphi 0, %s117
      %s135 = sphi 0, %s135
      %s137 = sphi 0, %s135
      %s138 = sphi 0, %s137
      %s152 = sphi 0, %s138
      %s156 = sphi 0, %s156
      %s158 = sphi 0, %s156
      %s159 = sphi 0, %s158
      %s173 = sphi 0, %s159
      %s177 = sphi 0, %s177
      %s179 = sphi 0, %s177
      %s180 = sphi 0, %s179
      %s194 = sphi 0, %s180
      %s200 = sphi 0, %s202
      %s203 = sphi 0, %s200
      %s204 = sphi 0, %s203
      %s220 = sphi 0, %s204
    $region4: #{tpu_custom_call.1} parent=1 // loop_header_branch
      %20 = sbr.rel (%p18) target = $region8
    $region5: #{tpu_custom_call.1} parent=1 // loop_body
      %s22 = ssub.s32 %s17, 1
      %s23 = ssub.s32 %s17, 2
      %s24 = sadd.s32 %s17, 1
      %s25 = ssub.s32 %s17, %s24
      %p26 = scmp.eq.s32.totalorder %s25, 0
      %s28 = sadd.s32 %s27, 1
      %s29 = scalar_select %p26, %s27, %s28
      %p32 = pneg %p26
      %p33 = scmp.eq.s32.totalorder %s17, 1
      %p34 = por %p32, %p33
      %p35 = scmp.ne.s32.totalorder %s27, %s30
      %p36 = scmp.eq.s32.totalorder %s17, 0
      %p37 = por %p35, %p36
      %p38 = scmp.ne.s32.totalorder %s27, %s30
      %p39 = scmp.eq.s32.totalorder %s22, 1
      %p40 = por %p38, %p39
      %p41 = scmp.ne.s32.totalorder %s30, %s31
      %p42 = scmp.eq.s32.totalorder %s22, 0
      %p43 = por %p41, %p42
      %p44 = scmp.ne.s32.totalorder %s30, %s31
      %p45 = scmp.eq.s32.totalorder %s23, 1
      %p46 = por %p44, %p45
      %p48 = scmp.ne.s32.totalorder %s31, %s47
      %p49 = scmp.eq.s32.totalorder %s23, 0
      %p50 = por %p48, %p49
      %s52 = sadd.s32 %s51, 1
      %p55 = scmp.eq.s32.totalorder %s17, 1
      %p56 = scmp.ne.s32.totalorder %s51, %s53
      %p57 = scmp.eq.s32.totalorder %s17, 0
      %p58 = por %p56, %p57
      %p59 = scmp.ne.s32.totalorder %s51, %s53
      %p60 = scmp.eq.s32.totalorder %s22, 1
      %p61 = por %p59, %p60
      %p62 = scmp.ne.s32.totalorder %s53, %s54
      %p63 = scmp.eq.s32.totalorder %s22, 0
      %p64 = por %p62, %p63
      %p65 = scmp.ne.s32.totalorder %s53, %s54
      %p66 = scmp.eq.s32.totalorder %s23, 1
      %p67 = por %p65, %p66
      %p69 = scmp.ne.s32.totalorder %s54, %s68
      %p70 = scmp.eq.s32.totalorder %s23, 0
      %p71 = por %p69, %p70
      %s73 = sadd.s32 %s72, 1
      %p76 = scmp.eq.s32.totalorder %s17, 1
      %p77 = scmp.ne.s32.totalorder %s72, %s74
      %p78 = scmp.eq.s32.totalorder %s17, 0
      %p79 = por %p77, %p78
      %p80 = scmp.ne.s32.totalorder %s72, %s74
      %p81 = scmp.eq.s32.totalorder %s22, 1
      %p82 = por %p80, %p81
      %p83 = scmp.ne.s32.totalorder %s74, %s75
      %p84 = scmp.eq.s32.totalorder %s22, 0
      %p85 = por %p83, %p84
      %p86 = scmp.ne.s32.totalorder %s74, %s75
      %p87 = scmp.eq.s32.totalorder %s23, 1
      %p88 = por %p86, %p87
      %p90 = scmp.ne.s32.totalorder %s75, %s89
      %p91 = scmp.eq.s32.totalorder %s23, 0
      %p92 = por %p90, %p91
      %s94 = sadd.s32 %s93, 1
      %p97 = scmp.eq.s32.totalorder %s17, 1
      %p98 = scmp.ne.s32.totalorder %s93, %s95
      %p99 = scmp.eq.s32.totalorder %s17, 0
      %p100 = por %p98, %p99
      %p101 = scmp.ne.s32.totalorder %s93, %s95
      %p102 = scmp.eq.s32.totalorder %s22, 1
      %p103 = por %p101, %p102
      %p104 = scmp.ne.s32.totalorder %s95, %s96
      %p105 = scmp.eq.s32.totalorder %s22, 0
      %p106 = por %p104, %p105
      %p107 = scmp.ne.s32.totalorder %s95, %s96
      %p108 = scmp.eq.s32.totalorder %s23, 1
      %p109 = por %p107, %p108
      %p111 = scmp.ne.s32.totalorder %s96, %s110
      %p112 = scmp.eq.s32.totalorder %s23, 0
      %p113 = por %p111, %p112
      %s115 = sadd.s32 %s114, 1
      %p118 = scmp.eq.s32.totalorder %s17, 1
      %p119 = scmp.ne.s32.totalorder %s114, %s116
      %p120 = scmp.eq.s32.totalorder %s17, 0
      %p121 = por %p119, %p120
      %p122 = scmp.ne.s32.totalorder %s114, %s116
      %p123 = scmp.eq.s32.totalorder %s22, 1
      %p124 = por %p122, %p123
      %p125 = scmp.ne.s32.totalorder %s116, %s117
      %p126 = scmp.eq.s32.totalorder %s22, 0
      %p127 = por %p125, %p126
      %p128 = scmp.ne.s32.totalorder %s116, %s117
      %p129 = scmp.eq.s32.totalorder %s23, 1
      %p130 = por %p128, %p129
      %p132 = scmp.ne.s32.totalorder %s117, %s131
      %p133 = scmp.eq.s32.totalorder %s23, 0
      %p134 = por %p132, %p133
      %s136 = sadd.s32 %s135, 1
      %p139 = scmp.eq.s32.totalorder %s17, 1
      %p140 = scmp.ne.s32.totalorder %s135, %s137
      %p141 = scmp.eq.s32.totalorder %s17, 0
      %p142 = por %p140, %p141
      %p143 = scmp.ne.s32.totalorder %s135, %s137
      %p144 = scmp.eq.s32.totalorder %s22, 1
      %p145 = por %p143, %p144
      %p146 = scmp.ne.s32.totalorder %s137, %s138
      %p147 = scmp.eq.s32.totalorder %s22, 0
      %p148 = por %p146, %p147
      %p149 = scmp.ne.s32.totalorder %s137, %s138
      %p150 = scmp.eq.s32.totalorder %s23, 1
      %p151 = por %p149, %p150
      %p153 = scmp.ne.s32.totalorder %s138, %s152
      %p154 = scmp.eq.s32.totalorder %s23, 0
      %p155 = por %p153, %p154
      %s157 = sadd.s32 %s156, 1
      %p160 = scmp.eq.s32.totalorder %s17, 1
      %p161 = scmp.ne.s32.totalorder %s156, %s158
      %p162 = scmp.eq.s32.totalorder %s17, 0
      %p163 = por %p161, %p162
      %p164 = scmp.ne.s32.totalorder %s156, %s158
      %p165 = scmp.eq.s32.totalorder %s22, 1
      %p166 = por %p164, %p165
      %p167 = scmp.ne.s32.totalorder %s158, %s159
      %p168 = scmp.eq.s32.totalorder %s22, 0
      %p169 = por %p167, %p168
      %p170 = scmp.ne.s32.totalorder %s158, %s159
      %p171 = scmp.eq.s32.totalorder %s23, 1
      %p172 = por %p170, %p171
      %p174 = scmp.ne.s32.totalorder %s159, %s173
      %p175 = scmp.eq.s32.totalorder %s23, 0
      %p176 = por %p174, %p175
      %s178 = sadd.s32 %s177, 1
      %p181 = scmp.eq.s32.totalorder %s17, 1
      %p182 = scmp.ne.s32.totalorder %s177, %s179
      %p183 = scmp.eq.s32.totalorder %s17, 0
      %p184 = por %p182, %p183
      %p185 = scmp.ne.s32.totalorder %s177, %s179
      %p186 = scmp.eq.s32.totalorder %s22, 1
      %p187 = por %p185, %p186
      %p188 = scmp.ne.s32.totalorder %s179, %s180
      %p189 = scmp.eq.s32.totalorder %s22, 0
      %p190 = por %p188, %p189
      %p191 = scmp.ne.s32.totalorder %s179, %s180
      %p192 = scmp.eq.s32.totalorder %s23, 1
      %p193 = por %p191, %p192
      %p195 = scmp.ne.s32.totalorder %s180, %s194
      %p196 = scmp.eq.s32.totalorder %s23, 0
      %p197 = por %p195, %p196
      %s198 = ssub.s32 %s17, %s24
      %p199 = scmp.eq.s32.totalorder %s198, 0
      %s201 = sadd.s32 %s200, 1
      %s202 = scalar_select %p199, %s200, %s201
      %p205 = pneg %p199
      %p206 = scmp.eq.s32.totalorder %s17, 1
      %p207 = por %p205, %p206
      %p208 = scmp.ne.s32.totalorder %s200, %s203
      %p209 = scmp.eq.s32.totalorder %s17, 0
      %p210 = por %p208, %p209
      %p211 = scmp.ne.s32.totalorder %s200, %s203
      %p212 = scmp.eq.s32.totalorder %s22, 1
      %p213 = por %p211, %p212
      %p214 = scmp.ne.s32.totalorder %s203, %s204
      %p215 = scmp.eq.s32.totalorder %s22, 0
      %p216 = por %p214, %p215
      %p217 = scmp.ne.s32.totalorder %s203, %s204
      %p218 = scmp.eq.s32.totalorder %s23, 1
      %p219 = por %p217, %p218
      %p221 = scmp.ne.s32.totalorder %s204, %s220
      %p222 = scmp.eq.s32.totalorder %s23, 0
      %p223 = por %p221, %p222
      %p224 = scmp.le.s32.totalorder 1, %s17
      %p225 = scmp.lt.s32.totalorder %s17, 3
      %p226 = pnand %p224, %p225
      %p227 = pneg %p226
      // Predicated region
      $region9: #{tpu_custom_call.1} parent=5 // pred_check
        _
      $region10: #{tpu_custom_call.1} parent=5 // pred_check_branch
        %229 = sbr.rel (%p226) target = $region12
      $region11: #{tpu_custom_call.1} parent=5 // pred_region
        %s230 = ssub.s32 %s17, 1
        // Predicated region
        $region13: #{tpu_custom_call.1} parent=11 // pred_check
          %p231 = pneg %p64
        $region14: #{tpu_custom_call.1} parent=11 // pred_check_branch
          %233 = sbr.rel (%p231) target = $region16
        $region15: #{tpu_custom_call.1} parent=11 // pred_region
          _
        $region16: #{tpu_custom_call.1} parent=11 // pred_fallthru
          _
        // Predicated region
        $region17: #{tpu_custom_call.1} parent=11 // pred_check
          %p234 = pneg %p85
        $region18: #{tpu_custom_call.1} parent=11 // pred_check_branch
          %236 = sbr.rel (%p234) target = $region20
        $region19: #{tpu_custom_call.1} parent=11 // pred_region
          _
        $region20: #{tpu_custom_call.1} parent=11 // pred_fallthru
          _
        // Predicated region
        $region21: #{tpu_custom_call.1} parent=11 // pred_check
          %p237 = pneg %p106
        $region22: #{tpu_custom_call.1} parent=11 // pred_check_branch
          %239 = sbr.rel (%p237) target = $region24
        $region23: #{tpu_custom_call.1} parent=11 // pred_region
          _
        $region24: #{tpu_custom_call.1} parent=11 // pred_fallthru
          _
        // Predicated region
        $region25: #{tpu_custom_call.1} parent=11 // pred_check
          %p240 = pneg %p127
        $region26: #{tpu_custom_call.1} parent=11 // pred_check_branch
          %242 = sbr.rel (%p240) target = $region28
        $region27: #{tpu_custom_call.1} parent=11 // pred_region
          _
        $region28: #{tpu_custom_call.1} parent=11 // pred_fallthru
          _
        // Predicated region
        $region29: #{tpu_custom_call.1} parent=11 // pred_check
          %p243 = pneg %p148
        $region30: #{tpu_custom_call.1} parent=11 // pred_check_branch
          %245 = sbr.rel (%p243) target = $region32
        $region31: #{tpu_custom_call.1} parent=11 // pred_region
          _
        $region32: #{tpu_custom_call.1} parent=11 // pred_fallthru
          _
        // Predicated region
        $region33: #{tpu_custom_call.1} parent=11 // pred_check
          %p246 = pneg %p169
        $region34: #{tpu_custom_call.1} parent=11 // pred_check_branch
          %248 = sbr.rel (%p246) target = $region36
        $region35: #{tpu_custom_call.1} parent=11 // pred_region
          _
        $region36: #{tpu_custom_call.1} parent=11 // pred_fallthru
          _
        // Predicated region
        $region37: #{tpu_custom_call.1} parent=11 // pred_check
          %p249 = pneg %p190
        $region38: #{tpu_custom_call.1} parent=11 // pred_check_branch
          %251 = sbr.rel (%p249) target = $region40
        $region39: #{tpu_custom_call.1} parent=11 // pred_region
          _
        $region40: #{tpu_custom_call.1} parent=11 // pred_fallthru
          _
      $region12: #{tpu_custom_call.1} parent=5 // pred_fallthru
        _
      %p252 = scmp.lt.s32.totalorder %s17, 2
      // Predicated region
      $region41: #{tpu_custom_call.1} parent=5 // pred_check
        %p253 = pneg %p252
      $region42: #{tpu_custom_call.1} parent=5 // pred_check_branch
        %255 = sbr.rel (%p253) target = $region44
      $region43: #{tpu_custom_call.1} parent=5 // pred_region
        // Predicated region
        $region45: #{tpu_custom_call.1} parent=43 // pred_check
          %p256 = pneg %p37
        $region46: #{tpu_custom_call.1} parent=43 // pred_check_branch
          %258 = sbr.rel (%p256) target = $region48
        $region47: #{tpu_custom_call.1} parent=43 // pred_region
          %s259 = smul.u32 16, %s17
          %p260 = scmp.lt.s32.totalorder %s259, 31
          %s261 = scalar_select %p260, %s259, 31
          %s262 = smul.addr %s261, 8
          %s263 = scalar_lea.vmem %s0, %s262
          %s264 = smul.u32 16, %s17
        $region48: #{tpu_custom_call.1} parent=43 // pred_fallthru
          _
      $region44: #{tpu_custom_call.1} parent=5 // pred_fallthru
        _
      %p265 = scmp.le.s32.totalorder 1, %s17
      %p266 = scmp.lt.s32.totalorder %s17, 3
      %p267 = pnand %p265, %p266
      %p268 = pneg %p267
      // Predicated region
      $region49: #{tpu_custom_call.1} parent=5 // pred_check
        _
      $region50: #{tpu_custom_call.1} parent=5 // pred_check_branch
        %270 = sbr.rel (%p267) target = $region52
      $region51: #{tpu_custom_call.1} parent=5 // pred_region
        %s271 = ssub.s32 %s17, 1
        %s272 = smul.u32 16, %s22
        %p273 = scmp.lt.s32.totalorder %s272, 31
        %s274 = scalar_select %p273, %s272, 31
        %s275 = smul.addr %s274, 8
        %s276 = scalar_lea.vmem %s0, %s275
        %p277 = pneg %p43
        %p278 = pneg %p40
        %p279 = pneg %p64
        %p280 = pneg %p61
        %p281 = pneg %p85
        %p282 = pneg %p82
        %p283 = pneg %p106
        %p284 = pneg %p103
        %p285 = pneg %p127
        %p286 = pneg %p124
        %p287 = pneg %p148
        %p288 = pneg %p145
        %p289 = pneg %p169
        %p290 = pneg %p166
        %p291 = pneg %p190
        %p292 = pneg %p187
        %p293 = pneg %p216
        %p294 = pneg %p213
        %s295 = sand.u32 %s203, 1
        %s296 = scalar_lea.sflag [#allocation3], %s295
        %s297 = sand.u32 %s203, 1
        %s298 = smul.addr %s297, 16
        %s299 = scalar_lea.vmem [#allocation2], %s298
        %s300 = smul.u32 16, %s22
        %p301 = scmp.lt.s32.totalorder %s300, 31
        %s302 = scalar_select %p301, %s300, 31
        %s303 = smul.addr %s302, 8
        %s304 = scalar_lea.vmem %s0, %s303
        %s305 = smul.u32 16, %s22
        %s306 = smul.u32 2, %s22
        %v307 = vld [vmem:[%s304] sm:$0xff]
        %v308 = vld [vmem:[%s304 + $0x8] sm:$0xff]
        %v309 = vld [vmem:[%s304 + $0x10] sm:$0xff]
        %v310 = vld [vmem:[%s304 + $0x18] sm:$0xff]
        %v311 = vld [vmem:[%s304 + $0x20] sm:$0xff]
        %v312 = vld [vmem:[%s304 + $0x28] sm:$0xff]
        %v313 = vld [vmem:[%s304 + $0x30] sm:$0xff]
        %v314 = vld [vmem:[%s304 + $0x38] sm:$0xff]
        %v315 = vld [vmem:[%s304 + $0x40] sm:$0xff]
        %v316 = vld [vmem:[%s304 + $0x48] sm:$0xff]
        %v317 = vld [vmem:[%s304 + $0x50] sm:$0xff]
        %v318 = vld [vmem:[%s304 + $0x58] sm:$0xff]
        %v319 = vld [vmem:[%s304 + $0x60] sm:$0xff]
        %v320 = vld [vmem:[%s304 + $0x68] sm:$0xff]
        %v321 = vld [vmem:[%s304 + $0x70] sm:$0xff]
        %v322 = vld [vmem:[%s304 + $0x78] sm:$0xff]
        %v323 = vld [vmem:[%s1] sm:$0xff]
        %v324 = vld [vmem:[%s1 + $0x8] sm:$0xff]
        %v325 = vld [vmem:[%s1 + $0x10] sm:$0xff]
        %v326 = vld [vmem:[%s1 + $0x18] sm:$0xff]
        %vm327 = vcmask 261120
        %v329 = vsel %vm327, %v307, 0
        %v332 = vsel %vm327, %v308, 0
        %v335 = vsel %vm327, %v309, 0
        %v338 = vsel %vm327, %v310, 0
        %v341 = vsel %vm327, %v311, 0
        %v344 = vsel %vm327, %v312, 0
        %v347 = vsel %vm327, %v313, 0
        %v350 = vsel %vm327, %v314, 0
        %v353 = vsel %vm327, %v315, 0
        %v356 = vsel %vm327, %v316, 0
        %v359 = vsel %vm327, %v317, 0
        %v362 = vsel %vm327, %v318, 0
        %v365 = vsel %vm327, %v319, 0
        %v368 = vsel %vm327, %v320, 0
        %v371 = vsel %vm327, %v321, 0
        %v374 = vsel %vm327, %v322, 0
        %376 = vmatprep.subr.mxu0 0.0
        %377 = vmatpush1.msra.mxu0 %v323
        %378 = vmatprep.subr.mxu0 0.0
        %379 = vmatpush1.msra.mxu0 %v324
        %380 = vmatprep.subr.mxu0 0.0
        %381 = vmatpush1.msra.mxu0 %v325
        %382 = vmatprep.subr.mxu0 0.0
        %383 = vmatpush1.msra.mxu0 %v326
        %384 = vmatprep.subr.mxu0 0.0
        %385 = vmatpush1.msra.mxu0 0.0
        %386 = vmatprep.subr.mxu0 0.0
        %387 = vmatpush1.msra.mxu0 0.0
        %388 = vmatprep.subr.mxu0 0.0
        %389 = vmatpush1.msra.mxu0 0.0
        %390 = vmatprep.subr.mxu0 0.0
        %391 = vmatpush1.msra.mxu0 0.0
        %392 = vmatprep.subr.mxu0 0.0
        %393 = vmatpush1.msra.mxu0 0.0
        %394 = vmatprep.subr.mxu0 0.0
        %395 = vmatpush1.msra.mxu0 0.0
        %396 = vmatprep.subr.mxu0 0.0
        %397 = vmatpush1.msra.mxu0 0.0
        %398 = vmatprep.subr.mxu0 0.0
        %399 = vmatpush1.msra.mxu0 0.0
        %400 = vmatprep.subr.mxu0 0.0
        %401 = vmatpush1.msra.mxu0 0.0
        %402 = vmatprep.subr.mxu0 0.0
        %403 = vmatpush1.msra.mxu0 0.0
        %404 = vmatprep.subr.mxu0 0.0
        %405 = vmatpush1.msra.mxu0 0.0
        %406 = vmatprep.subr.mxu0 0.0
        %407 = vmatpush1.msra.mxu0 0.0
        %408 = vmatprep.subr.mxu0 0.0
        %409 = vmatpush1.msra.mxu0 0.0
        %410 = vmatprep.subr.mxu0 0.0
        %411 = vmatpush1.msra.mxu0 0.0
        %412 = vmatprep.subr.mxu0 0.0
        %413 = vmatpush1.msra.mxu0 0.0
        %414 = vmatprep.subr.mxu0 0.0
        %415 = vmatpush1.msra.mxu0 0.0
        %416 = vmatprep.subr.mxu0 0.0
        %417 = vmatpush1.msra.mxu0 0.0
        %418 = vmatprep.subr.mxu0 0.0
        %419 = vmatpush1.msra.mxu0 0.0
        %420 = vmatprep.subr.mxu0 0.0
        %421 = vmatpush1.msra.mxu0 0.0
        %422 = vmatprep.subr.mxu0 0.0
        %423 = vmatpush1.msra.mxu0 0.0
        %424 = vmatprep.subr.mxu0 0.0
        %425 = vmatpush1.msra.mxu0 0.0
        %426 = vmatprep.subr.mxu0 0.0
        %427 = vmatpush1.msra.mxu0 0.0
        %428 = vmatprep.subr.mxu0 0.0
        %429 = vmatpush1.msra.mxu0 0.0
        %430 = vmatprep.subr.mxu0 0.0
        %431 = vmatpush1.msra.mxu0 0.0
        %432 = vmatprep.subr.mxu0 0.0
        %433 = vmatpush1.msra.mxu0 0.0
        %434 = vmatprep.subr.mxu0 0.0
        %435 = vmatpush1.msra.mxu0 0.0
        %436 = vmatprep.subr.mxu0 0.0
        %437 = vmatpush1.msra.mxu0 0.0
        %438 = vmatprep.subr.mxu0 0.0
        %439 = vmatpush1.msra.mxu0 0.0
        %440 = vmatprep.mubr.f32.mxu0 0.0
        %441 = vmatmul.mubr.f32.gmra.mrb[0].mxu0 %v329
        %v442 = vpop.f32.mrb[0].mxu0
        %v443 = vadd.f32 0.0, %v442
        %v444 = vpop.f32.mrb[0].mxu0
        %445 = vmatprep.mubr.f32.mxu0 0.0
        %446 = vmatmul.mubr.f32.gmra.mrb[0].mxu0 %v332
        %v447 = vpop.f32.mrb[0].mxu0
        %v448 = vadd.f32 0.0, %v447
        %v449 = vpop.f32.mrb[0].mxu0
        %450 = vmatprep.mubr.f32.mxu0 0.0
        %451 = vmatmul.mubr.f32.gmra.mrb[0].mxu0 %v335
        %v452 = vpop.f32.mrb[0].mxu0
        %v453 = vadd.f32 0.0, %v452
        %v454 = vpop.f32.mrb[0].mxu0
        %455 = vmatprep.mubr.f32.mxu0 0.0
        %456 = vmatmul.mubr.f32.gmra.mrb[0].mxu0 %v338
        %v457 = vpop.f32.mrb[0].mxu0
        %v458 = vadd.f32 0.0, %v457
        %v459 = vpop.f32.mrb[0].mxu0
        %460 = vmatprep.mubr.f32.mxu0 0.0
        %461 = vmatmul.mubr.f32.gmra.mrb[0].mxu0 %v341
        %v462 = vpop.f32.mrb[0].mxu0
        %v463 = vadd.f32 0.0, %v462
        %v464 = vpop.f32.mrb[0].mxu0
        %465 = vmatprep.mubr.f32.mxu0 0.0
        %466 = vmatmul.mubr.f32.gmra.mrb[0].mxu0 %v344
        %v467 = vpop.f32.mrb[0].mxu0
        %v468 = vadd.f32 0.0, %v467
        %v469 = vpop.f32.mrb[0].mxu0
        %470 = vmatprep.mubr.f32.mxu0 0.0
        %471 = vmatmul.mubr.f32.gmra.mrb[0].mxu0 %v347
        %v472 = vpop.f32.mrb[0].mxu0
        %v473 = vadd.f32 0.0, %v472
        %v474 = vpop.f32.mrb[0].mxu0
        %475 = vmatprep.mubr.f32.mxu0 0.0
        %476 = vmatmul.mubr.f32.gmra.mrb[0].mxu0 %v350
        %v477 = vpop.f32.mrb[0].mxu0
        %v478 = vadd.f32 0.0, %v477
        %v479 = vpop.f32.mrb[0].mxu0
        %480 = vmatprep.mubr.f32.mxu0 0.0
        %481 = vmatmul.mubr.f32.gmra.mrb[0].mxu0 %v353
        %v482 = vpop.f32.mrb[0].mxu0
        %v483 = vadd.f32 0.0, %v482
        %v484 = vpop.f32.mrb[0].mxu0
        %485 = vmatprep.mubr.f32.mxu0 0.0
        %486 = vmatmul.mubr.f32.gmra.mrb[0].mxu0 %v356
        %v487 = vpop.f32.mrb[0].mxu0
        %v488 = vadd.f32 0.0, %v487
        %v489 = vpop.f32.mrb[0].mxu0
        %490 = vmatprep.mubr.f32.mxu0 0.0
        %491 = vmatmul.mubr.f32.gmra.mrb[0].mxu0 %v359
        %v492 = vpop.f32.mrb[0].mxu0
        %v493 = vadd.f32 0.0, %v492
        %v494 = vpop.f32.mrb[0].mxu0
        %495 = vmatprep.mubr.f32.mxu0 0.0
        %496 = vmatmul.mubr.f32.gmra.mrb[0].mxu0 %v362
        %v497 = vpop.f32.mrb[0].mxu0
        %v498 = vadd.f32 0.0, %v497
        %v499 = vpop.f32.mrb[0].mxu0
        %500 = vmatprep.mubr.f32.mxu0 0.0
        %501 = vmatmul.mubr.f32.gmra.mrb[0].mxu0 %v365
        %v502 = vpop.f32.mrb[0].mxu0
        %v503 = vadd.f32 0.0, %v502
        %v504 = vpop.f32.mrb[0].mxu0
        %505 = vmatprep.mubr.f32.mxu0 0.0
        %506 = vmatmul.mubr.f32.gmra.mrb[0].mxu0 %v368
        %v507 = vpop.f32.mrb[0].mxu0
        %v508 = vadd.f32 0.0, %v507
        %v509 = vpop.f32.mrb[0].mxu0
        %510 = vmatprep.mubr.f32.mxu0 0.0
        %511 = vmatmul.mubr.f32.gmra.mrb[0].mxu0 %v371
        %v512 = vpop.f32.mrb[0].mxu0
        %v513 = vadd.f32 0.0, %v512
        %v514 = vpop.f32.mrb[0].mxu0
        %515 = vmatprep.mubr.f32.mxu0 0.0
        %516 = vmatmul.mubr.f32.gmra.mrb[0].mxu0 %v374
        %v517 = vpop.f32.mrb[0].mxu0
        %v518 = vadd.f32 0.0, %v517
        %v519 = vpop.f32.mrb[0].mxu0
        %520 = vdwg.mxu0
        %v521 = vlaneseq
        %v522 = vshrl.u32 %v521, 7
        %v523 = vadd.s32 %v522, 8
        %v524 = vadd.s32 %v522, 16
        %v525 = vadd.s32 %v522, 24
        %v526 = vadd.s32 %v522, 32
        %v527 = vadd.s32 %v522, 40
        %v528 = vadd.s32 %v522, 48
        %v529 = vadd.s32 %v522, 56
        %v530 = vadd.s32 %v522, 64
        %v531 = vadd.s32 %v522, 72
        %v532 = vadd.s32 %v522, 80
        %v533 = vadd.s32 %v522, 88
        %v534 = vadd.s32 %v522, 96
        %v535 = vadd.s32 %v522, 104
        %v536 = vadd.s32 %v522, 112
        %v537 = vadd.s32 %v522, 120
        %vm538 = vcmp.lt.s32.totalorder %v522, 0
        %v539 = vsub.s32 0, %v522
        %v540 = vsel %vm538, %v539, %v522
        %v541 = vshrl.u32 %v540, 4
        %v542 = vand.u32 %v540, 15
        %v543 = vsub.s32 0, %v542
        %v544 = vsel %vm538, %v543, %v542
        %vm545 = vcmp.lt.s32.totalorder %v523, 0
        %v546 = vsub.s32 0, %v523
        %v547 = vsel %vm545, %v546, %v523
        %v548 = vshrl.u32 %v547, 4
        %v549 = vand.u32 %v547, 15
        %v550 = vsub.s32 0, %v549
        %v551 = vsel %vm545, %v550, %v549
        %vm552 = vcmp.lt.s32.totalorder %v524, 0
        %v553 = vsub.s32 0, %v524
        %v554 = vsel %vm552, %v553, %v524
        %v555 = vshrl.u32 %v554, 4
        %v556 = vand.u32 %v554, 15
        %v557 = vsub.s32 0, %v556
        %v558 = vsel %vm552, %v557, %v556
        %vm559 = vcmp.lt.s32.totalorder %v525, 0
        %v560 = vsub.s32 0, %v525
        %v561 = vsel %vm559, %v560, %v525
        %v562 = vshrl.u32 %v561, 4
        %v563 = vand.u32 %v561, 15
        %v564 = vsub.s32 0, %v563
        %v565 = vsel %vm559, %v564, %v563
        %vm566 = vcmp.lt.s32.totalorder %v526, 0
        %v567 = vsub.s32 0, %v526
        %v568 = vsel %vm566, %v567, %v526
        %v569 = vshrl.u32 %v568, 4
        %v570 = vand.u32 %v568, 15
        %v571 = vsub.s32 0, %v570
        %v572 = vsel %vm566, %v571, %v570
        %vm573 = vcmp.lt.s32.totalorder %v527, 0
        %v574 = vsub.s32 0, %v527
        %v575 = vsel %vm573, %v574, %v527
        %v576 = vshrl.u32 %v575, 4
        %v577 = vand.u32 %v575, 15
        %v578 = vsub.s32 0, %v577
        %v579 = vsel %vm573, %v578, %v577
        %vm580 = vcmp.lt.s32.totalorder %v528, 0
        %v581 = vsub.s32 0, %v528
        %v582 = vsel %vm580, %v581, %v528
        %v583 = vshrl.u32 %v582, 4
        %v584 = vand.u32 %v582, 15
        %v585 = vsub.s32 0, %v584
        %v586 = vsel %vm580, %v585, %v584
        %vm587 = vcmp.lt.s32.totalorder %v529, 0
        %v588 = vsub.s32 0, %v529
        %v589 = vsel %vm587, %v588, %v529
        %v590 = vshrl.u32 %v589, 4
        %v591 = vand.u32 %v589, 15
        %v592 = vsub.s32 0, %v591
        %v593 = vsel %vm587, %v592, %v591
        %vm594 = vcmp.lt.s32.totalorder %v530, 0
        %v595 = vsub.s32 0, %v530
        %v596 = vsel %vm594, %v595, %v530
        %v597 = vshrl.u32 %v596, 4
        %v598 = vand.u32 %v596, 15
        %v599 = vsub.s32 0, %v598
        %v600 = vsel %vm594, %v599, %v598
        %vm601 = vcmp.lt.s32.totalorder %v531, 0
        %v602 = vsub.s32 0, %v531
        %v603 = vsel %vm601, %v602, %v531
        %v604 = vshrl.u32 %v603, 4
        %v605 = vand.u32 %v603, 15
        %v606 = vsub.s32 0, %v605
        %v607 = vsel %vm601, %v606, %v605
        %vm608 = vcmp.lt.s32.totalorder %v532, 0
        %v609 = vsub.s32 0, %v532
        %v610 = vsel %vm608, %v609, %v532
        %v611 = vshrl.u32 %v610, 4
        %v612 = vand.u32 %v610, 15
        %v613 = vsub.s32 0, %v612
        %v614 = vsel %vm608, %v613, %v612
        %vm615 = vcmp.lt.s32.totalorder %v533, 0
        %v616 = vsub.s32 0, %v533
        %v617 = vsel %vm615, %v616, %v533
        %v618 = vshrl.u32 %v617, 4
        %v619 = vand.u32 %v617, 15
        %v620 = vsub.s32 0, %v619
        %v621 = vsel %vm615, %v620, %v619
        %vm622 = vcmp.lt.s32.totalorder %v534, 0
        %v623 = vsub.s32 0, %v534
        %v624 = vsel %vm622, %v623, %v534
        %v625 = vshrl.u32 %v624, 4
        %v626 = vand.u32 %v624, 15
        %v627 = vsub.s32 0, %v626
        %v628 = vsel %vm622, %v627, %v626
        %vm629 = vcmp.lt.s32.totalorder %v535, 0
        %v630 = vsub.s32 0, %v535
        %v631 = vsel %vm629, %v630, %v535
        %v632 = vshrl.u32 %v631, 4
        %v633 = vand.u32 %v631, 15
        %v634 = vsub.s32 0, %v633
        %v635 = vsel %vm629, %v634, %v633
        %vm636 = vcmp.lt.s32.totalorder %v536, 0
        %v637 = vsub.s32 0, %v536
        %v638 = vsel %vm636, %v637, %v536
        %v639 = vshrl.u32 %v638, 4
        %v640 = vand.u32 %v638, 15
        %v641 = vsub.s32 0, %v640
        %v642 = vsel %vm636, %v641, %v640
        %vm643 = vcmp.lt.s32.totalorder %v537, 0
        %v644 = vsub.s32 0, %v537
        %v645 = vsel %vm643, %v644, %v537
        %v646 = vshrl.u32 %v645, 4
        %v647 = vand.u32 %v645, 15
        %v648 = vsub.s32 0, %v647
        %v649 = vsel %vm643, %v648, %v647
        %vm650 = vcmp.ne.s32.totalorder %v544, 0
        %vm651 = vcmp.ne.s32.totalorder %v551, 0
        %vm652 = vcmp.ne.s32.totalorder %v558, 0
        %vm653 = vcmp.ne.s32.totalorder %v565, 0
        %vm654 = vcmp.ne.s32.totalorder %v572, 0
        %vm655 = vcmp.ne.s32.totalorder %v579, 0
        %vm656 = vcmp.ne.s32.totalorder %v586, 0
        %vm657 = vcmp.ne.s32.totalorder %v593, 0
        %vm658 = vcmp.ne.s32.totalorder %v600, 0
        %vm659 = vcmp.ne.s32.totalorder %v607, 0
        %vm660 = vcmp.ne.s32.totalorder %v614, 0
        %vm661 = vcmp.ne.s32.totalorder %v621, 0
        %vm662 = vcmp.ne.s32.totalorder %v628, 0
        %vm663 = vcmp.ne.s32.totalorder %v635, 0
        %vm664 = vcmp.ne.s32.totalorder %v642, 0
        %vm665 = vcmp.ne.s32.totalorder %v649, 0
        %vm666 = vcmp.lt.s32.totalorder %v544, 0
        %vm667 = vcmp.lt.s32.totalorder %v551, 0
        %vm668 = vcmp.lt.s32.totalorder %v558, 0
        %vm669 = vcmp.lt.s32.totalorder %v565, 0
        %vm670 = vcmp.lt.s32.totalorder %v572, 0
        %vm671 = vcmp.lt.s32.totalorder %v579, 0
        %vm672 = vcmp.lt.s32.totalorder %v586, 0
        %vm673 = vcmp.lt.s32.totalorder %v593, 0
        %vm674 = vcmp.lt.s32.totalorder %v600, 0
        %vm675 = vcmp.lt.s32.totalorder %v607, 0
        %vm676 = vcmp.lt.s32.totalorder %v614, 0
        %vm677 = vcmp.lt.s32.totalorder %v621, 0
        %vm678 = vcmp.lt.s32.totalorder %v628, 0
        %vm679 = vcmp.lt.s32.totalorder %v635, 0
        %vm680 = vcmp.lt.s32.totalorder %v642, 0
        %vm681 = vcmp.lt.s32.totalorder %v649, 0
        %vm682 = vmand %vm666, %vm650
        %vm683 = vmand %vm667, %vm651
        %vm684 = vmand %vm668, %vm652
        %vm685 = vmand %vm669, %vm653
        %vm686 = vmand %vm670, %vm654
        %vm687 = vmand %vm671, %vm655
        %vm688 = vmand %vm672, %vm656
        %vm689 = vmand %vm673, %vm657
        %vm690 = vmand %vm674, %vm658
        %vm691 = vmand %vm675, %vm659
        %vm692 = vmand %vm676, %vm660
        %vm693 = vmand %vm677, %vm661
        %vm694 = vmand %vm678, %vm662
        %vm695 = vmand %vm679, %vm663
        %vm696 = vmand %vm680, %vm664
        %vm697 = vmand %vm681, %vm665
        %v698 = vadd.s32 %v544, 16
        %v699 = vadd.s32 %v551, 16
        %v700 = vadd.s32 %v558, 16
        %v701 = vadd.s32 %v565, 16
        %v702 = vadd.s32 %v572, 16
        %v703 = vadd.s32 %v579, 16
        %v704 = vadd.s32 %v586, 16
        %v705 = vadd.s32 %v593, 16
        %v706 = vadd.s32 %v600, 16
        %v707 = vadd.s32 %v607, 16
        %v708 = vadd.s32 %v614, 16
        %v709 = vadd.s32 %v621, 16
        %v710 = vadd.s32 %v628, 16
        %v711 = vadd.s32 %v635, 16
        %v712 = vadd.s32 %v642, 16
        %v713 = vadd.s32 %v649, 16
        %v714 = vsel %vm682, %v698, %v544
        %v715 = vsel %vm683, %v699, %v551
        %v716 = vsel %vm684, %v700, %v558
        %v717 = vsel %vm685, %v701, %v565
        %v718 = vsel %vm686, %v702, %v572
        %v719 = vsel %vm687, %v703, %v579
        %v720 = vsel %vm688, %v704, %v586
        %v721 = vsel %vm689, %v705, %v593
        %v722 = vsel %vm690, %v706, %v600
        %v723 = vsel %vm691, %v707, %v607
        %v724 = vsel %vm692, %v708, %v614
        %v725 = vsel %vm693, %v709, %v621
        %v726 = vsel %vm694, %v710, %v628
        %v727 = vsel %vm695, %v711, %v635
        %v728 = vsel %vm696, %v712, %v642
        %v729 = vsel %vm697, %v713, %v649
        %v730 = vlaneseq
        %v731 = vand.u32 %v730, 127
        %vm732 = vcmp.lt.s32.totalorder %v731, 0
        %v733 = vsub.s32 0, %v731
        %v734 = vsel %vm732, %v733, %v731
        %v735 = vshrl.u32 %v734, 4
        %v736 = vand.u32 %v734, 15
        %v737 = vsub.s32 0, %v736
        %v738 = vsel %vm732, %v737, %v736
        %vm739 = vcmp.ne.s32.totalorder %v738, 0
        %vm740 = vcmp.lt.s32.totalorder %v738, 0
        %vm741 = vmand %vm740, %vm739
        %v742 = vadd.s32 %v738, 16
        %v743 = vsel %vm741, %v742, %v738
        %vm744 = vcmp.eq.s32.totalorder %v714, %v743
        %vm745 = vcmp.eq.s32.totalorder %v715, %v743
        %vm746 = vcmp.eq.s32.totalorder %v716, %v743
        %vm747 = vcmp.eq.s32.totalorder %v717, %v743
        %vm748 = vcmp.eq.s32.totalorder %v718, %v743
        %vm749 = vcmp.eq.s32.totalorder %v719, %v743
        %vm750 = vcmp.eq.s32.totalorder %v720, %v743
        %vm751 = vcmp.eq.s32.totalorder %v721, %v743
        %vm752 = vcmp.eq.s32.totalorder %v722, %v743
        %vm753 = vcmp.eq.s32.totalorder %v723, %v743
        %vm754 = vcmp.eq.s32.totalorder %v724, %v743
        %vm755 = vcmp.eq.s32.totalorder %v725, %v743
        %vm756 = vcmp.eq.s32.totalorder %v726, %v743
        %vm757 = vcmp.eq.s32.totalorder %v727, %v743
        %vm758 = vcmp.eq.s32.totalorder %v728, %v743
        %vm759 = vcmp.eq.s32.totalorder %v729, %v743
        %776 = vrot.lane.b32.xlu0 %v443, 96
        %v777 = vpop.permute.xlu0 %776
        %778 = vrot.lane.b32.xlu0 %v448, 96
        %v779 = vpop.permute.xlu0 %778
        %780 = vrot.lane.b32.xlu0 %v453, 96
        %v781 = vpop.permute.xlu0 %780
        %782 = vrot.lane.b32.xlu0 %v458, 96
        %v783 = vpop.permute.xlu0 %782
        %784 = vrot.lane.b32.xlu0 %v463, 96
        %v785 = vpop.permute.xlu0 %784
        %786 = vrot.lane.b32.xlu0 %v468, 96
        %v787 = vpop.permute.xlu0 %786
        %788 = vrot.lane.b32.xlu0 %v473, 96
        %v789 = vpop.permute.xlu0 %788
        %790 = vrot.lane.b32.xlu0 %v478, 96
        %v791 = vpop.permute.xlu0 %790
        %792 = vrot.lane.b32.xlu0 %v483, 96
        %v793 = vpop.permute.xlu0 %792
        %794 = vrot.lane.b32.xlu0 %v488, 96
        %v795 = vpop.permute.xlu0 %794
        %796 = vrot.lane.b32.xlu0 %v493, 96
        %v797 = vpop.permute.xlu0 %796
        %798 = vrot.lane.b32.xlu0 %v498, 96
        %v799 = vpop.permute.xlu0 %798
        %800 = vrot.lane.b32.xlu0 %v503, 96
        %v801 = vpop.permute.xlu0 %800
        %802 = vrot.lane.b32.xlu0 %v508, 96
        %v803 = vpop.permute.xlu0 %802
        %804 = vrot.lane.b32.xlu0 %v513, 96
        %v805 = vpop.permute.xlu0 %804
        %806 = vrot.lane.b32.xlu0 %v518, 96
        %v807 = vpop.permute.xlu0 %806
        %v808 = vsel %vm327, %v443, 0
        %v810 = vsel %vm327, %v448, 0
        %v812 = vsel %vm327, %v453, 0
        %v814 = vsel %vm327, %v458, 0
        %v816 = vsel %vm327, %v463, 0
        %v818 = vsel %vm327, %v468, 0
        %v820 = vsel %vm327, %v473, 0
        %v822 = vsel %vm327, %v478, 0
        %v824 = vsel %vm327, %v483, 0
        %v826 = vsel %vm327, %v488, 0
        %v828 = vsel %vm327, %v493, 0
        %v830 = vsel %vm327, %v498, 0
        %v832 = vsel %vm327, %v503, 0
        %v834 = vsel %vm327, %v508, 0
        %v836 = vsel %vm327, %v513, 0
        %v838 = vsel %vm327, %v518, 0
        %v840 = vsel %vm327, %v777, 0
        %v842 = vsel %vm327, %v779, 0
        %v844 = vsel %vm327, %v781, 0
        %v846 = vsel %vm327, %v783, 0
        %v848 = vsel %vm327, %v785, 0
        %v850 = vsel %vm327, %v787, 0
        %v852 = vsel %vm327, %v789, 0
        %v854 = vsel %vm327, %v791, 0
        %v856 = vsel %vm327, %v793, 0
        %v858 = vsel %vm327, %v795, 0
        %v860 = vsel %vm327, %v797, 0
        %v862 = vsel %vm327, %v799, 0
        %v864 = vsel %vm327, %v801, 0
        %v866 = vsel %vm327, %v803, 0
        %v868 = vsel %vm327, %v805, 0
        %v870 = vsel %vm327, %v807, 0
        %872 = vmatprep.subr.mxu0 0.0
        %873 = vmatpush1.xpose.msra.mxu0 %v840
        %874 = vmatprep.subr.mxu0 0.0
        %875 = vmatpush1.xpose.msra.mxu0 %v842
        %876 = vmatprep.subr.mxu0 0.0
        %877 = vmatpush1.xpose.msra.mxu0 %v844
        %878 = vmatprep.subr.mxu0 0.0
        %879 = vmatpush1.xpose.msra.mxu0 %v846
        %880 = vmatprep.subr.mxu0 0.0
        %881 = vmatpush1.xpose.msra.mxu0 %v848
        %882 = vmatprep.subr.mxu0 0.0
        %883 = vmatpush1.xpose.msra.mxu0 %v850
        %884 = vmatprep.subr.mxu0 0.0
        %885 = vmatpush1.xpose.msra.mxu0 %v852
        %886 = vmatprep.subr.mxu0 0.0
        %887 = vmatpush1.xpose.msra.mxu0 %v854
        %888 = vmatprep.subr.mxu0 0.0
        %889 = vmatpush1.xpose.msra.mxu0 %v856
        %890 = vmatprep.subr.mxu0 0.0
        %891 = vmatpush1.xpose.msra.mxu0 %v858
        %892 = vmatprep.subr.mxu0 0.0
        %893 = vmatpush1.xpose.msra.mxu0 %v860
        %894 = vmatprep.subr.mxu0 0.0
        %895 = vmatpush1.xpose.msra.mxu0 %v862
        %896 = vmatprep.subr.mxu0 0.0
        %897 = vmatpush1.xpose.msra.mxu0 %v864
        %898 = vmatprep.subr.mxu0 0.0
        %899 = vmatpush1.xpose.msra.mxu0 %v866
        %900 = vmatprep.subr.mxu0 0.0
        %901 = vmatpush1.xpose.msra.mxu0 %v868
        %902 = vmatprep.subr.mxu0 0.0
        %903 = vmatpush1.xpose.msra.mxu0 %v870
        %904 = vmatprep.subr.mxu0 0.0
        %905 = vmatpush1.xpose.msra.mxu0 0.0
        %906 = vmatprep.subr.mxu0 0.0
        %907 = vmatpush1.xpose.msra.mxu0 0.0
        %908 = vmatprep.subr.mxu0 0.0
        %909 = vmatpush1.xpose.msra.mxu0 0.0
        %910 = vmatprep.subr.mxu0 0.0
        %911 = vmatpush1.xpose.msra.mxu0 0.0
        %912 = vmatprep.subr.mxu0 0.0
        %913 = vmatpush1.xpose.msra.mxu0 0.0
        %914 = vmatprep.subr.mxu0 0.0
        %915 = vmatpush1.xpose.msra.mxu0 0.0
        %916 = vmatprep.subr.mxu0 0.0
        %917 = vmatpush1.xpose.msra.mxu0 0.0
        %918 = vmatprep.subr.mxu0 0.0
        %919 = vmatpush1.xpose.msra.mxu0 0.0
        %920 = vmatprep.subr.mxu0 0.0
        %921 = vmatpush1.xpose.msra.mxu0 0.0
        %922 = vmatprep.subr.mxu0 0.0
        %923 = vmatpush1.xpose.msra.mxu0 0.0
        %924 = vmatprep.subr.mxu0 0.0
        %925 = vmatpush1.xpose.msra.mxu0 0.0
        %926 = vmatprep.subr.mxu0 0.0
        %927 = vmatpush1.xpose.msra.mxu0 0.0
        %928 = vmatprep.subr.mxu0 0.0
        %929 = vmatpush1.xpose.msra.mxu0 0.0
        %930 = vmatprep.subr.mxu0 0.0
        %931 = vmatpush1.xpose.msra.mxu0 0.0
        %932 = vmatprep.subr.mxu0 0.0
        %933 = vmatpush1.xpose.msra.mxu0 0.0
        %934 = vmatprep.subr.mxu0 0.0
        %935 = vmatpush1.xpose.msra.mxu0 0.0
        %936 = vmatprep.mubr.f32.mxu0 0.0
        %937 = vmatmul.mubr.f32.gmra.mrb[0].mxu0 %v808
        %v938 = vpop.f32.mrb[0].mxu0
        %v939 = vadd.f32 0.0, %v938
        %v940 = vpop.f32.mrb[0].mxu0
        %941 = vmatprep.mubr.f32.mxu0 0.0
        %942 = vmatmul.mubr.f32.gmra.mrb[0].mxu0 %v810
        %v943 = vpop.f32.mrb[0].mxu0
        %v944 = vadd.f32 0.0, %v943
        %v945 = vpop.f32.mrb[0].mxu0
        %946 = vmatprep.mubr.f32.mxu0 0.0
        %947 = vmatmul.mubr.f32.gmra.mrb[0].mxu0 %v812
        %v948 = vpop.f32.mrb[0].mxu0
        %v949 = vadd.f32 0.0, %v948
        %v950 = vpop.f32.mrb[0].mxu0
        %951 = vmatprep.mubr.f32.mxu0 0.0
        %952 = vmatmul.mubr.f32.gmra.mrb[0].mxu0 %v814
        %v953 = vpop.f32.mrb[0].mxu0
        %v954 = vadd.f32 0.0, %v953
        %v955 = vpop.f32.mrb[0].mxu0
        %956 = vmatprep.mubr.f32.mxu0 0.0
        %957 = vmatmul.mubr.f32.gmra.mrb[0].mxu0 %v816
        %v958 = vpop.f32.mrb[0].mxu0
        %v959 = vadd.f32 0.0, %v958
        %v960 = vpop.f32.mrb[0].mxu0
        %961 = vmatprep.mubr.f32.mxu0 0.0
        %962 = vmatmul.mubr.f32.gmra.mrb[0].mxu0 %v818
        %v963 = vpop.f32.mrb[0].mxu0
        %v964 = vadd.f32 0.0, %v963
        %v965 = vpop.f32.mrb[0].mxu0
        %966 = vmatprep.mubr.f32.mxu0 0.0
        %967 = vmatmul.mubr.f32.gmra.mrb[0].mxu0 %v820
        %v968 = vpop.f32.mrb[0].mxu0
        %v969 = vadd.f32 0.0, %v968
        %v970 = vpop.f32.mrb[0].mxu0
        %971 = vmatprep.mubr.f32.mxu0 0.0
        %972 = vmatmul.mubr.f32.gmra.mrb[0].mxu0 %v822
        %v973 = vpop.f32.mrb[0].mxu0
        %v974 = vadd.f32 0.0, %v973
        %v975 = vpop.f32.mrb[0].mxu0
        %976 = vmatprep.mubr.f32.mxu0 0.0
        %977 = vmatmul.mubr.f32.gmra.mrb[0].mxu0 %v824
        %v978 = vpop.f32.mrb[0].mxu0
        %v979 = vadd.f32 0.0, %v978
        %v980 = vpop.f32.mrb[0].mxu0
        %981 = vmatprep.mubr.f32.mxu0 0.0
        %982 = vmatmul.mubr.f32.gmra.mrb[0].mxu0 %v826
        %v983 = vpop.f32.mrb[0].mxu0
        %v984 = vadd.f32 0.0, %v983
        %v985 = vpop.f32.mrb[0].mxu0
        %986 = vmatprep.mubr.f32.mxu0 0.0
        %987 = vmatmul.mubr.f32.gmra.mrb[0].mxu0 %v828
        %v988 = vpop.f32.mrb[0].mxu0
        %v989 = vadd.f32 0.0, %v988
        %v990 = vpop.f32.mrb[0].mxu0
        %991 = vmatprep.mubr.f32.mxu0 0.0
        %992 = vmatmul.mubr.f32.gmra.mrb[0].mxu0 %v830
        %v993 = vpop.f32.mrb[0].mxu0
        %v994 = vadd.f32 0.0, %v993
        %v995 = vpop.f32.mrb[0].mxu0
        %996 = vmatprep.mubr.f32.mxu0 0.0
        %997 = vmatmul.mubr.f32.gmra.mrb[0].mxu0 %v832
        %v998 = vpop.f32.mrb[0].mxu0
        %v999 = vadd.f32 0.0, %v998
        %v1000 = vpop.f32.mrb[0].mxu0
        %1001 = vmatprep.mubr.f32.mxu0 0.0
        %1002 = vmatmul.mubr.f32.gmra.mrb[0].mxu0 %v834
        %v1003 = vpop.f32.mrb[0].mxu0
        %v1004 = vadd.f32 0.0, %v1003
        %v1005 = vpop.f32.mrb[0].mxu0
        %1006 = vmatprep.mubr.f32.mxu0 0.0
        %1007 = vmatmul.mubr.f32.gmra.mrb[0].mxu0 %v836
        %v1008 = vpop.f32.mrb[0].mxu0
        %v1009 = vadd.f32 0.0, %v1008
        %v1010 = vpop.f32.mrb[0].mxu0
        %1011 = vmatprep.mubr.f32.mxu0 0.0
        %1012 = vmatmul.mubr.f32.gmra.mrb[0].mxu0 %v838
        %v1013 = vpop.f32.mrb[0].mxu0
        %v1014 = vadd.f32 0.0, %v1013
        %v1015 = vpop.f32.mrb[0].mxu0
        %1016 = vdwg.mxu0
        %v1017 = vsel %vm744, %v939, -1e+30
        %v1018 = vsel %vm745, %v944, -1e+30
        %v1019 = vsel %vm746, %v949, -1e+30
        %v1020 = vsel %vm747, %v954, -1e+30
        %v1021 = vsel %vm748, %v959, -1e+30
        %v1022 = vsel %vm749, %v964, -1e+30
        %v1023 = vsel %vm750, %v969, -1e+30
        %v1024 = vsel %vm751, %v974, -1e+30
        %v1025 = vsel %vm752, %v979, -1e+30
        %v1026 = vsel %vm753, %v984, -1e+30
        %v1027 = vsel %vm754, %v989, -1e+30
        %v1028 = vsel %vm755, %v994, -1e+30
        %v1029 = vsel %vm756, %v999, -1e+30
        %v1030 = vsel %vm757, %v1004, -1e+30
        %v1031 = vsel %vm758, %v1009, -1e+30
        %v1032 = vsel %vm759, %v1014, -1e+30
        %1033 = vmax.xlane.f32.xlu0 %v1017
        %v1034 = vpop.xlane.xlu0 %1033
        %1035 = vmax.xlane.f32.xlu0 %v1018
        %v1036 = vpop.xlane.xlu0 %1035
        %1037 = vmax.xlane.f32.xlu0 %v1019
        %v1038 = vpop.xlane.xlu0 %1037
        %1039 = vmax.xlane.f32.xlu0 %v1020
        %v1040 = vpop.xlane.xlu0 %1039
        %1041 = vmax.xlane.f32.xlu0 %v1021
        %v1042 = vpop.xlane.xlu0 %1041
        %1043 = vmax.xlane.f32.xlu0 %v1022
        %v1044 = vpop.xlane.xlu0 %1043
        %1045 = vmax.xlane.f32.xlu0 %v1023
        %v1046 = vpop.xlane.xlu0 %1045
        %1047 = vmax.xlane.f32.xlu0 %v1024
        %v1048 = vpop.xlane.xlu0 %1047
        %1049 = vmax.xlane.f32.xlu0 %v1025
        %v1050 = vpop.xlane.xlu0 %1049
        %1051 = vmax.xlane.f32.xlu0 %v1026
        %v1052 = vpop.xlane.xlu0 %1051
        %1053 = vmax.xlane.f32.xlu0 %v1027
        %v1054 = vpop.xlane.xlu0 %1053
        %1055 = vmax.xlane.f32.xlu0 %v1028
        %v1056 = vpop.xlane.xlu0 %1055
        %1057 = vmax.xlane.f32.xlu0 %v1029
        %v1058 = vpop.xlane.xlu0 %1057
        %1059 = vmax.xlane.f32.xlu0 %v1030
        %v1060 = vpop.xlane.xlu0 %1059
        %1061 = vmax.xlane.f32.xlu0 %v1031
        %v1062 = vpop.xlane.xlu0 %1061
        %1063 = vmax.xlane.f32.xlu0 %v1032
        %v1064 = vpop.xlane.xlu0 %1063
        %v1065 = vsub.f32 %v1017, %v1034
        %v1066 = vsub.f32 %v1018, %v1036
        %v1067 = vsub.f32 %v1019, %v1038
        %v1068 = vsub.f32 %v1020, %v1040
        %v1069 = vsub.f32 %v1021, %v1042
        %v1070 = vsub.f32 %v1022, %v1044
        %v1071 = vsub.f32 %v1023, %v1046
        %v1072 = vsub.f32 %v1024, %v1048
        %v1073 = vsub.f32 %v1025, %v1050
        %v1074 = vsub.f32 %v1026, %v1052
        %v1075 = vsub.f32 %v1027, %v1054
        %v1076 = vsub.f32 %v1028, %v1056
        %v1077 = vsub.f32 %v1029, %v1058
        %v1078 = vsub.f32 %v1030, %v1060
        %v1079 = vsub.f32 %v1031, %v1062
        %v1080 = vsub.f32 %v1032, %v1064
        %v1081 = vmul.f32 %v1065, 1.442695
        %v1082 = vpow.pop %v1081
        %v1083 = vmul.f32 %v1066, 1.442695
        %v1084 = vpow.pop %v1083
        %v1085 = vmul.f32 %v1067, 1.442695
        %v1086 = vpow.pop %v1085
        %v1087 = vmul.f32 %v1068, 1.442695
        %v1088 = vpow.pop %v1087
        %v1089 = vmul.f32 %v1069, 1.442695
        %v1090 = vpow.pop %v1089
        %v1091 = vmul.f32 %v1070, 1.442695
        %v1092 = vpow.pop %v1091
        %v1093 = vmul.f32 %v1071, 1.442695
        %v1094 = vpow.pop %v1093
        %v1095 = vmul.f32 %v1072, 1.442695
        %v1096 = vpow.pop %v1095
        %v1097 = vmul.f32 %v1073, 1.442695
        %v1098 = vpow.pop %v1097
        %v1099 = vmul.f32 %v1074, 1.442695
        %v1100 = vpow.pop %v1099
        %v1101 = vmul.f32 %v1075, 1.442695
        %v1102 = vpow.pop %v1101
        %v1103 = vmul.f32 %v1076, 1.442695
        %v1104 = vpow.pop %v1103
        %v1105 = vmul.f32 %v1077, 1.442695
        %v1106 = vpow.pop %v1105
        %v1107 = vmul.f32 %v1078, 1.442695
        %v1108 = vpow.pop %v1107
        %v1109 = vmul.f32 %v1079, 1.442695
        %v1110 = vpow.pop %v1109
        %v1111 = vmul.f32 %v1080, 1.442695
        %v1112 = vpow.pop %v1111
        %1113 = vadd.xlane.f32.xlu0 %v1082
        %v1114 = vpop.xlane.xlu0 %1113
        %1115 = vadd.xlane.f32.xlu0 %v1084
        %v1116 = vpop.xlane.xlu0 %1115
        %1117 = vadd.xlane.f32.xlu0 %v1086
        %v1118 = vpop.xlane.xlu0 %1117
        %1119 = vadd.xlane.f32.xlu0 %v1088
        %v1120 = vpop.xlane.xlu0 %1119
        %1121 = vadd.xlane.f32.xlu0 %v1090
        %v1122 = vpop.xlane.xlu0 %1121
        %1123 = vadd.xlane.f32.xlu0 %v1092
        %v1124 = vpop.xlane.xlu0 %1123
        %1125 = vadd.xlane.f32.xlu0 %v1094
        %v1126 = vpop.xlane.xlu0 %1125
        %1127 = vadd.xlane.f32.xlu0 %v1096
        %v1128 = vpop.xlane.xlu0 %1127
        %1129 = vadd.xlane.f32.xlu0 %v1098
        %v1130 = vpop.xlane.xlu0 %1129
        %1131 = vadd.xlane.f32.xlu0 %v1100
        %v1132 = vpop.xlane.xlu0 %1131
        %1133 = vadd.xlane.f32.xlu0 %v1102
        %v1134 = vpop.xlane.xlu0 %1133
        %1135 = vadd.xlane.f32.xlu0 %v1104
        %v1136 = vpop.xlane.xlu0 %1135
        %1137 = vadd.xlane.f32.xlu0 %v1106
        %v1138 = vpop.xlane.xlu0 %1137
        %1139 = vadd.xlane.f32.xlu0 %v1108
        %v1140 = vpop.xlane.xlu0 %1139
        %1141 = vadd.xlane.f32.xlu0 %v1110
        %v1142 = vpop.xlane.xlu0 %1141
        %1143 = vadd.xlane.f32.xlu0 %v1112
        %v1144 = vpop.xlane.xlu0 %1143
        %1145 = vrot.lane.b32.xlu0 %v443, 64
        %v1146 = vpop.permute.xlu0 %1145
        %1147 = vrot.lane.b32.xlu0 %v448, 64
        %v1148 = vpop.permute.xlu0 %1147
        %1149 = vrot.lane.b32.xlu0 %v453, 64
        %v1150 = vpop.permute.xlu0 %1149
        %1151 = vrot.lane.b32.xlu0 %v458, 64
        %v1152 = vpop.permute.xlu0 %1151
        %1153 = vrot.lane.b32.xlu0 %v463, 64
        %v1154 = vpop.permute.xlu0 %1153
        %1155 = vrot.lane.b32.xlu0 %v468, 64
        %v1156 = vpop.permute.xlu0 %1155
        %1157 = vrot.lane.b32.xlu0 %v473, 64
        %v1158 = vpop.permute.xlu0 %1157
        %1159 = vrot.lane.b32.xlu0 %v478, 64
        %v1160 = vpop.permute.xlu0 %1159
        %1161 = vrot.lane.b32.xlu0 %v483, 64
        %v1162 = vpop.permute.xlu0 %1161
        %1163 = vrot.lane.b32.xlu0 %v488, 64
        %v1164 = vpop.permute.xlu0 %1163
        %1165 = vrot.lane.b32.xlu0 %v493, 64
        %v1166 = vpop.permute.xlu0 %1165
        %1167 = vrot.lane.b32.xlu0 %v498, 64
        %v1168 = vpop.permute.xlu0 %1167
        %1169 = vrot.lane.b32.xlu0 %v503, 64
        %v1170 = vpop.permute.xlu0 %1169
        %1171 = vrot.lane.b32.xlu0 %v508, 64
        %v1172 = vpop.permute.xlu0 %1171
        %1173 = vrot.lane.b32.xlu0 %v513, 64
        %v1174 = vpop.permute.xlu0 %1173
        %1175 = vrot.lane.b32.xlu0 %v518, 64
        %v1176 = vpop.permute.xlu0 %1175
        %1193 = vmatprep.subr.mxu0 0.0
        %1194 = vmatpush1.msra.mxu0 %v1146
        %1195 = vmatprep.subr.mxu0 0.0
        %1196 = vmatpush1.msra.mxu0 %v1148
        %1197 = vmatprep.subr.mxu0 0.0
        %1198 = vmatpush1.msra.mxu0 %v1150
        %1199 = vmatprep.subr.mxu0 0.0
        %1200 = vmatpush1.msra.mxu0 %v1152
        %1201 = vmatprep.subr.mxu0 0.0
        %1202 = vmatpush1.msra.mxu0 %v1154
        %1203 = vmatprep.subr.mxu0 0.0
        %1204 = vmatpush1.msra.mxu0 %v1156
        %1205 = vmatprep.subr.mxu0 0.0
        %1206 = vmatpush1.msra.mxu0 %v1158
        %1207 = vmatprep.subr.mxu0 0.0
        %1208 = vmatpush1.msra.mxu0 %v1160
        %1209 = vmatprep.subr.mxu0 0.0
        %1210 = vmatpush1.msra.mxu0 %v1162
        %1211 = vmatprep.subr.mxu0 0.0
        %1212 = vmatpush1.msra.mxu0 %v1164
        %1213 = vmatprep.subr.mxu0 0.0
        %1214 = vmatpush1.msra.mxu0 %v1166
        %1215 = vmatprep.subr.mxu0 0.0
        %1216 = vmatpush1.msra.mxu0 %v1168
        %1217 = vmatprep.subr.mxu0 0.0
        %1218 = vmatpush1.msra.mxu0 %v1170
        %1219 = vmatprep.subr.mxu0 0.0
        %1220 = vmatpush1.msra.mxu0 %v1172
        %1221 = vmatprep.subr.mxu0 0.0
        %1222 = vmatpush1.msra.mxu0 %v1174
        %1223 = vmatprep.subr.mxu0 0.0
        %1224 = vmatpush1.msra.mxu0 %v1176
        %1225 = vmatprep.subr.mxu0 0.0
        %1226 = vmatpush1.msra.mxu0 0.0
        %1227 = vmatprep.subr.mxu0 0.0
        %1228 = vmatpush1.msra.mxu0 0.0
        %1229 = vmatprep.subr.mxu0 0.0
        %1230 = vmatpush1.msra.mxu0 0.0
        %1231 = vmatprep.subr.mxu0 0.0
        %1232 = vmatpush1.msra.mxu0 0.0
        %1233 = vmatprep.subr.mxu0 0.0
        %1234 = vmatpush1.msra.mxu0 0.0
        %1235 = vmatprep.subr.mxu0 0.0
        %1236 = vmatpush1.msra.mxu0 0.0
        %1237 = vmatprep.subr.mxu0 0.0
        %1238 = vmatpush1.msra.mxu0 0.0
        %1239 = vmatprep.subr.mxu0 0.0
        %1240 = vmatpush1.msra.mxu0 0.0
        %1241 = vmatprep.subr.mxu0 0.0
        %1242 = vmatpush1.msra.mxu0 0.0
        %1243 = vmatprep.subr.mxu0 0.0
        %1244 = vmatpush1.msra.mxu0 0.0
        %1245 = vmatprep.subr.mxu0 0.0
        %1246 = vmatpush1.msra.mxu0 0.0
        %1247 = vmatprep.subr.mxu0 0.0
        %1248 = vmatpush1.msra.mxu0 0.0
        %1249 = vmatprep.subr.mxu0 0.0
        %1250 = vmatpush1.msra.mxu0 0.0
        %1251 = vmatprep.subr.mxu0 0.0
        %1252 = vmatpush1.msra.mxu0 0.0
        %1253 = vmatprep.subr.mxu0 0.0
        %1254 = vmatpush1.msra.mxu0 0.0
        %1255 = vmatprep.subr.mxu0 0.0
        %1256 = vmatpush1.msra.mxu0 0.0
        %1257 = vmatprep.mubr.f32.mxu0 0.0
        %1258 = vmatmul.mubr.f32.gmra.mrb[0].mxu0 %v1082
        %v1259 = vpop.f32.mrb[0].mxu0
        %v1260 = vadd.f32 0.0, %v1259
        %v1261 = vpop.f32.mrb[0].mxu0
        %1262 = vmatprep.mubr.f32.mxu0 0.0
        %1263 = vmatmul.mubr.f32.gmra.mrb[0].mxu0 %v1084
        %v1264 = vpop.f32.mrb[0].mxu0
        %v1265 = vadd.f32 0.0, %v1264
        %v1266 = vpop.f32.mrb[0].mxu0
        %1267 = vmatprep.mubr.f32.mxu0 0.0
        %1268 = vmatmul.mubr.f32.gmra.mrb[0].mxu0 %v1086
        %v1269 = vpop.f32.mrb[0].mxu0
        %v1270 = vadd.f32 0.0, %v1269
        %v1271 = vpop.f32.mrb[0].mxu0
        %1272 = vmatprep.mubr.f32.mxu0 0.0
        %1273 = vmatmul.mubr.f32.gmra.mrb[0].mxu0 %v1088
        %v1274 = vpop.f32.mrb[0].mxu0
        %v1275 = vadd.f32 0.0, %v1274
        %v1276 = vpop.f32.mrb[0].mxu0
        %1277 = vmatprep.mubr.f32.mxu0 0.0
        %1278 = vmatmul.mubr.f32.gmra.mrb[0].mxu0 %v1090
        %v1279 = vpop.f32.mrb[0].mxu0
        %v1280 = vadd.f32 0.0, %v1279
        %v1281 = vpop.f32.mrb[0].mxu0
        %1282 = vmatprep.mubr.f32.mxu0 0.0
        %1283 = vmatmul.mubr.f32.gmra.mrb[0].mxu0 %v1092
        %v1284 = vpop.f32.mrb[0].mxu0
        %v1285 = vadd.f32 0.0, %v1284
        %v1286 = vpop.f32.mrb[0].mxu0
        %1287 = vmatprep.mubr.f32.mxu0 0.0
        %1288 = vmatmul.mubr.f32.gmra.mrb[0].mxu0 %v1094
        %v1289 = vpop.f32.mrb[0].mxu0
        %v1290 = vadd.f32 0.0, %v1289
        %v1291 = vpop.f32.mrb[0].mxu0
        %1292 = vmatprep.mubr.f32.mxu0 0.0
        %1293 = vmatmul.mubr.f32.gmra.mrb[0].mxu0 %v1096
        %v1294 = vpop.f32.mrb[0].mxu0
        %v1295 = vadd.f32 0.0, %v1294
        %v1296 = vpop.f32.mrb[0].mxu0
        %1297 = vmatprep.mubr.f32.mxu0 0.0
        %1298 = vmatmul.mubr.f32.gmra.mrb[0].mxu0 %v1098
        %v1299 = vpop.f32.mrb[0].mxu0
        %v1300 = vadd.f32 0.0, %v1299
        %v1301 = vpop.f32.mrb[0].mxu0
        %1302 = vmatprep.mubr.f32.mxu0 0.0
        %1303 = vmatmul.mubr.f32.gmra.mrb[0].mxu0 %v1100
        %v1304 = vpop.f32.mrb[0].mxu0
        %v1305 = vadd.f32 0.0, %v1304
        %v1306 = vpop.f32.mrb[0].mxu0
        %1307 = vmatprep.mubr.f32.mxu0 0.0
        %1308 = vmatmul.mubr.f32.gmra.mrb[0].mxu0 %v1102
        %v1309 = vpop.f32.mrb[0].mxu0
        %v1310 = vadd.f32 0.0, %v1309
        %v1311 = vpop.f32.mrb[0].mxu0
        %1312 = vmatprep.mubr.f32.mxu0 0.0
        %1313 = vmatmul.mubr.f32.gmra.mrb[0].mxu0 %v1104
        %v1314 = vpop.f32.mrb[0].mxu0
        %v1315 = vadd.f32 0.0, %v1314
        %v1316 = vpop.f32.mrb[0].mxu0
        %1317 = vmatprep.mubr.f32.mxu0 0.0
        %1318 = vmatmul.mubr.f32.gmra.mrb[0].mxu0 %v1106
        %v1319 = vpop.f32.mrb[0].mxu0
        %v1320 = vadd.f32 0.0, %v1319
        %v1321 = vpop.f32.mrb[0].mxu0
        %1322 = vmatprep.mubr.f32.mxu0 0.0
        %1323 = vmatmul.mubr.f32.gmra.mrb[0].mxu0 %v1108
        %v1324 = vpop.f32.mrb[0].mxu0
        %v1325 = vadd.f32 0.0, %v1324
        %v1326 = vpop.f32.mrb[0].mxu0
        %1327 = vmatprep.mubr.f32.mxu0 0.0
        %1328 = vmatmul.mubr.f32.gmra.mrb[0].mxu0 %v1110
        %v1329 = vpop.f32.mrb[0].mxu0
        %v1330 = vadd.f32 0.0, %v1329
        %v1331 = vpop.f32.mrb[0].mxu0
        %1332 = vmatprep.mubr.f32.mxu0 0.0
        %1333 = vmatmul.mubr.f32.gmra.mrb[0].mxu0 %v1112
        %v1334 = vpop.f32.mrb[0].mxu0
        %v1335 = vadd.f32 0.0, %v1334
        %v1336 = vpop.f32.mrb[0].mxu0
        %1337 = vdwg.mxu0
        %v1338 = vrcp.pop %v1114
        %v1339 = vrcp.pop %v1116
        %v1340 = vrcp.pop %v1118
        %v1341 = vrcp.pop %v1120
        %v1342 = vrcp.pop %v1122
        %v1343 = vrcp.pop %v1124
        %v1344 = vrcp.pop %v1126
        %v1345 = vrcp.pop %v1128
        %v1346 = vrcp.pop %v1130
        %v1347 = vrcp.pop %v1132
        %v1348 = vrcp.pop %v1134
        %v1349 = vrcp.pop %v1136
        %v1350 = vrcp.pop %v1138
        %v1351 = vrcp.pop %v1140
        %v1352 = vrcp.pop %v1142
        %v1353 = vrcp.pop %v1144
        %v1354 = vmul.f32 %v1260, %v1338
        %v1355 = vmul.f32 %v1265, %v1339
        %v1356 = vmul.f32 %v1270, %v1340
        %v1357 = vmul.f32 %v1275, %v1341
        %v1358 = vmul.f32 %v1280, %v1342
        %v1359 = vmul.f32 %v1285, %v1343
        %v1360 = vmul.f32 %v1290, %v1344
        %v1361 = vmul.f32 %v1295, %v1345
        %v1362 = vmul.f32 %v1300, %v1346
        %v1363 = vmul.f32 %v1305, %v1347
        %v1364 = vmul.f32 %v1310, %v1348
        %v1365 = vmul.f32 %v1315, %v1349
        %v1366 = vmul.f32 %v1320, %v1350
        %v1367 = vmul.f32 %v1325, %v1351
        %v1368 = vmul.f32 %v1330, %v1352
        %v1369 = vmul.f32 %v1335, %v1353
        %v1370 = vadd.f32 %v1354, %v307
        %v1371 = vadd.f32 %v1355, %v308
        %v1372 = vadd.f32 %v1356, %v309
        %v1373 = vadd.f32 %v1357, %v310
        %v1374 = vadd.f32 %v1358, %v311
        %v1375 = vadd.f32 %v1359, %v312
        %v1376 = vadd.f32 %v1360, %v313
        %v1377 = vadd.f32 %v1361, %v314
        %v1378 = vadd.f32 %v1362, %v315
        %v1379 = vadd.f32 %v1363, %v316
        %v1380 = vadd.f32 %v1364, %v317
        %v1381 = vadd.f32 %v1365, %v318
        %v1382 = vadd.f32 %v1366, %v319
        %v1383 = vadd.f32 %v1367, %v320
        %v1384 = vadd.f32 %v1368, %v321
        %v1385 = vadd.f32 %v1369, %v322
        %v1386 = vld [vmem:[%s6] sm:$0xff]
        %v1387 = vld [vmem:[%s6 + $0x8] sm:$0xff]
        %v1388 = vld [vmem:[%s6 + $0x10] sm:$0xff]
        %v1389 = vld [vmem:[%s6 + $0x18] sm:$0xff]
        %v1390 = vld [vmem:[%s6 + $0x20] sm:$0xff]
        %v1391 = vld [vmem:[%s6 + $0x28] sm:$0xff]
        %v1392 = vld [vmem:[%s6 + $0x30] sm:$0xff]
        %v1393 = vld [vmem:[%s6 + $0x38] sm:$0xff]
        %v1394 = vld [vmem:[%s6 + $0x40] sm:$0xff]
        %v1395 = vld [vmem:[%s6 + $0x48] sm:$0xff]
        %v1396 = vld [vmem:[%s6 + $0x50] sm:$0xff]
        %v1397 = vld [vmem:[%s6 + $0x58] sm:$0xff]
        %v1398 = vld [vmem:[%s6 + $0x60] sm:$0xff]
        %v1399 = vld [vmem:[%s6 + $0x68] sm:$0xff]
        %v1400 = vld [vmem:[%s6 + $0x70] sm:$0xff]
        %v1401 = vld [vmem:[%s6 + $0x78] sm:$0xff]
        %1403 = vset.pattern.permute.xlu0 0
        %1404 = vperm.xlu0 %1403, %v1386
        %v1405 = vpop.permute.xlu0 %1404
        %1408 = vset.pattern.permute.xlu0 0
        %1409 = vperm.xlu0 %1408, %v1387
        %v1410 = vpop.permute.xlu0 %1409
        %1413 = vset.pattern.permute.xlu0 0
        %1414 = vperm.xlu0 %1413, %v1388
        %v1415 = vpop.permute.xlu0 %1414
        %1418 = vset.pattern.permute.xlu0 0
        %1419 = vperm.xlu0 %1418, %v1389
        %v1420 = vpop.permute.xlu0 %1419
        %1423 = vset.pattern.permute.xlu0 0
        %1424 = vperm.xlu0 %1423, %v1390
        %v1425 = vpop.permute.xlu0 %1424
        %1428 = vset.pattern.permute.xlu0 0
        %1429 = vperm.xlu0 %1428, %v1391
        %v1430 = vpop.permute.xlu0 %1429
        %1433 = vset.pattern.permute.xlu0 0
        %1434 = vperm.xlu0 %1433, %v1392
        %v1435 = vpop.permute.xlu0 %1434
        %1438 = vset.pattern.permute.xlu0 0
        %1439 = vperm.xlu0 %1438, %v1393
        %v1440 = vpop.permute.xlu0 %1439
        %1443 = vset.pattern.permute.xlu0 0
        %1444 = vperm.xlu0 %1443, %v1394
        %v1445 = vpop.permute.xlu0 %1444
        %1448 = vset.pattern.permute.xlu0 0
        %1449 = vperm.xlu0 %1448, %v1395
        %v1450 = vpop.permute.xlu0 %1449
        %1453 = vset.pattern.permute.xlu0 0
        %1454 = vperm.xlu0 %1453, %v1396
        %v1455 = vpop.permute.xlu0 %1454
        %1458 = vset.pattern.permute.xlu0 0
        %1459 = vperm.xlu0 %1458, %v1397
        %v1460 = vpop.permute.xlu0 %1459
        %1463 = vset.pattern.permute.xlu0 0
        %1464 = vperm.xlu0 %1463, %v1398
        %v1465 = vpop.permute.xlu0 %1464
        %1468 = vset.pattern.permute.xlu0 0
        %1469 = vperm.xlu0 %1468, %v1399
        %v1470 = vpop.permute.xlu0 %1469
        %1473 = vset.pattern.permute.xlu0 0
        %1474 = vperm.xlu0 %1473, %v1400
        %v1475 = vpop.permute.xlu0 %1474
        %1478 = vset.pattern.permute.xlu0 0
        %1479 = vperm.xlu0 %1478, %v1401
        %v1480 = vpop.permute.xlu0 %1479
        %v1482 = vmul.f32 %v1370, %v1405
        %v1483 = vmul.f32 %v1371, %v1410
        %v1484 = vmul.f32 %v1372, %v1415
        %v1485 = vmul.f32 %v1373, %v1420
        %v1486 = vmul.f32 %v1374, %v1425
        %v1487 = vmul.f32 %v1375, %v1430
        %v1488 = vmul.f32 %v1376, %v1435
        %v1489 = vmul.f32 %v1377, %v1440
        %v1490 = vmul.f32 %v1378, %v1445
        %v1491 = vmul.f32 %v1379, %v1450
        %v1492 = vmul.f32 %v1380, %v1455
        %v1493 = vmul.f32 %v1381, %v1460
        %v1494 = vmul.f32 %v1382, %v1465
        %v1495 = vmul.f32 %v1383, %v1470
        %v1496 = vmul.f32 %v1384, %v1475
        %v1497 = vmul.f32 %v1385, %v1480
        %1498 = vset.pattern.permute.xlu0 1
        %1499 = vperm.xlu0 %1498, %v1386
        %v1500 = vpop.permute.xlu0 %1499
        %1502 = vset.pattern.permute.xlu0 1
        %1503 = vperm.xlu0 %1502, %v1387
        %v1504 = vpop.permute.xlu0 %1503
        %1506 = vset.pattern.permute.xlu0 1
        %1507 = vperm.xlu0 %1506, %v1388
        %v1508 = vpop.permute.xlu0 %1507
        %1510 = vset.pattern.permute.xlu0 1
        %1511 = vperm.xlu0 %1510, %v1389
        %v1512 = vpop.permute.xlu0 %1511
        %1514 = vset.pattern.permute.xlu0 1
        %1515 = vperm.xlu0 %1514, %v1390
        %v1516 = vpop.permute.xlu0 %1515
        %1518 = vset.pattern.permute.xlu0 1
        %1519 = vperm.xlu0 %1518, %v1391
        %v1520 = vpop.permute.xlu0 %1519
        %1522 = vset.pattern.permute.xlu0 1
        %1523 = vperm.xlu0 %1522, %v1392
        %v1524 = vpop.permute.xlu0 %1523
        %1526 = vset.pattern.permute.xlu0 1
        %1527 = vperm.xlu0 %1526, %v1393
        %v1528 = vpop.permute.xlu0 %1527
        %1530 = vset.pattern.permute.xlu0 1
        %1531 = vperm.xlu0 %1530, %v1394
        %v1532 = vpop.permute.xlu0 %1531
        %1534 = vset.pattern.permute.xlu0 1
        %1535 = vperm.xlu0 %1534, %v1395
        %v1536 = vpop.permute.xlu0 %1535
        %1538 = vset.pattern.permute.xlu0 1
        %1539 = vperm.xlu0 %1538, %v1396
        %v1540 = vpop.permute.xlu0 %1539
        %1542 = vset.pattern.permute.xlu0 1
        %1543 = vperm.xlu0 %1542, %v1397
        %v1544 = vpop.permute.xlu0 %1543
        %1546 = vset.pattern.permute.xlu0 1
        %1547 = vperm.xlu0 %1546, %v1398
        %v1548 = vpop.permute.xlu0 %1547
        %1550 = vset.pattern.permute.xlu0 1
        %1551 = vperm.xlu0 %1550, %v1399
        %v1552 = vpop.permute.xlu0 %1551
        %1554 = vset.pattern.permute.xlu0 1
        %1555 = vperm.xlu0 %1554, %v1400
        %v1556 = vpop.permute.xlu0 %1555
        %1558 = vset.pattern.permute.xlu0 1
        %1559 = vperm.xlu0 %1558, %v1401
        %v1560 = vpop.permute.xlu0 %1559
        %v1562 = vadd.f32 %v1482, %v1500
        %v1563 = vadd.f32 %v1483, %v1504
        %v1564 = vadd.f32 %v1484, %v1508
        %v1565 = vadd.f32 %v1485, %v1512
        %v1566 = vadd.f32 %v1486, %v1516
        %v1567 = vadd.f32 %v1487, %v1520
        %v1568 = vadd.f32 %v1488, %v1524
        %v1569 = vadd.f32 %v1489, %v1528
        %v1570 = vadd.f32 %v1490, %v1532
        %v1571 = vadd.f32 %v1491, %v1536
        %v1572 = vadd.f32 %v1492, %v1540
        %v1573 = vadd.f32 %v1493, %v1544
        %v1574 = vadd.f32 %v1494, %v1548
        %v1575 = vadd.f32 %v1495, %v1552
        %v1576 = vadd.f32 %v1496, %v1556
        %v1577 = vadd.f32 %v1497, %v1560
        %v1578 = vld [vmem:[%s2] sm:$0xff]
        %v1579 = vld [vmem:[%s2 + $0x8] sm:$0xff]
        %v1580 = vld [vmem:[%s2 + $0x10] sm:$0xff]
        %v1581 = vld [vmem:[%s2 + $0x18] sm:$0xff]
        %v1582 = vld [vmem:[%s3] sm:$0x1]
        %v1584 = vlaneseq
        %v1585 = vshrl.u32 %v1584, 7
        %v1586 = vsub.s32 0, %v1585
        %v1587 = vrot.slane %v1582, %v1586
        %v1590 = vsel %vm327, %v1562, 0
        %v1593 = vsel %vm327, %v1563, 0
        %v1596 = vsel %vm327, %v1564, 0
        %v1599 = vsel %vm327, %v1565, 0
        %v1602 = vsel %vm327, %v1566, 0
        %v1605 = vsel %vm327, %v1567, 0
        %v1608 = vsel %vm327, %v1568, 0
        %v1611 = vsel %vm327, %v1569, 0
        %v1614 = vsel %vm327, %v1570, 0
        %v1617 = vsel %vm327, %v1571, 0
        %v1620 = vsel %vm327, %v1572, 0
        %v1623 = vsel %vm327, %v1573, 0
        %v1626 = vsel %vm327, %v1574, 0
        %v1629 = vsel %vm327, %v1575, 0
        %v1632 = vsel %vm327, %v1576, 0
        %v1635 = vsel %vm327, %v1577, 0
        %1637 = vmatprep.subr.mxu0 0.0
        %1638 = vmatpush1.msra.mxu0 %v1578
        %1639 = vmatprep.subr.mxu0 0.0
        %1640 = vmatpush1.msra.mxu0 %v1579
        %1641 = vmatprep.subr.mxu0 0.0
        %1642 = vmatpush1.msra.mxu0 %v1580
        %1643 = vmatprep.subr.mxu0 0.0
        %1644 = vmatpush1.msra.mxu0 %v1581
        %1645 = vmatprep.subr.mxu0 0.0
        %1646 = vmatpush1.msra.mxu0 0.0
        %1647 = vmatprep.subr.mxu0 0.0
        %1648 = vmatpush1.msra.mxu0 0.0
        %1649 = vmatprep.subr.mxu0 0.0
        %1650 = vmatpush1.msra.mxu0 0.0
        %1651 = vmatprep.subr.mxu0 0.0
        %1652 = vmatpush1.msra.mxu0 0.0
        %1653 = vmatprep.subr.mxu0 0.0
        %1654 = vmatpush1.msra.mxu0 0.0
        %1655 = vmatprep.subr.mxu0 0.0
        %1656 = vmatpush1.msra.mxu0 0.0
        %1657 = vmatprep.subr.mxu0 0.0
        %1658 = vmatpush1.msra.mxu0 0.0
        %1659 = vmatprep.subr.mxu0 0.0
        %1660 = vmatpush1.msra.mxu0 0.0
        %1661 = vmatprep.subr.mxu0 0.0
        %1662 = vmatpush1.msra.mxu0 0.0
        %1663 = vmatprep.subr.mxu0 0.0
        %1664 = vmatpush1.msra.mxu0 0.0
        %1665 = vmatprep.subr.mxu0 0.0
        %1666 = vmatpush1.msra.mxu0 0.0
        %1667 = vmatprep.subr.mxu0 0.0
        %1668 = vmatpush1.msra.mxu0 0.0
        %1669 = vmatprep.subr.mxu0 0.0
        %1670 = vmatpush1.msra.mxu0 0.0
        %1671 = vmatprep.subr.mxu0 0.0
        %1672 = vmatpush1.msra.mxu0 0.0
        %1673 = vmatprep.subr.mxu0 0.0
        %1674 = vmatpush1.msra.mxu0 0.0
        %1675 = vmatprep.subr.mxu0 0.0
        %1676 = vmatpush1.msra.mxu0 0.0
        %1677 = vmatprep.subr.mxu0 0.0
        %1678 = vmatpush1.msra.mxu0 0.0
        %1679 = vmatprep.subr.mxu0 0.0
        %1680 = vmatpush1.msra.mxu0 0.0
        %1681 = vmatprep.subr.mxu0 0.0
        %1682 = vmatpush1.msra.mxu0 0.0
        %1683 = vmatprep.subr.mxu0 0.0
        %1684 = vmatpush1.msra.mxu0 0.0
        %1685 = vmatprep.subr.mxu0 0.0
        %1686 = vmatpush1.msra.mxu0 0.0
        %1687 = vmatprep.subr.mxu0 0.0
        %1688 = vmatpush1.msra.mxu0 0.0
        %1689 = vmatprep.subr.mxu0 0.0
        %1690 = vmatpush1.msra.mxu0 0.0
        %1691 = vmatprep.subr.mxu0 0.0
        %1692 = vmatpush1.msra.mxu0 0.0
        %1693 = vmatprep.subr.mxu0 0.0
        %1694 = vmatpush1.msra.mxu0 0.0
        %1695 = vmatprep.subr.mxu0 0.0
        %1696 = vmatpush1.msra.mxu0 0.0
        %1697 = vmatprep.subr.mxu0 0.0
        %1698 = vmatpush1.msra.mxu0 0.0
        %1699 = vmatprep.subr.mxu0 0.0
        %1700 = vmatpush1.msra.mxu0 0.0
        %1701 = vmatprep.mubr.f32.mxu0 0.0
        %1702 = vmatmul.mubr.f32.gmra.mrb[0].mxu0 %v1590
        %v1703 = vpop.f32.mrb[0].mxu0
        %v1704 = vadd.f32 %v1587, %v1703
        %v1705 = vpop.f32.mrb[0].mxu0
        %1706 = vmatprep.mubr.f32.mxu0 0.0
        %1707 = vmatmul.mubr.f32.gmra.mrb[0].mxu0 %v1593
        %v1708 = vpop.f32.mrb[0].mxu0
        %v1709 = vadd.f32 %v1587, %v1708
        %v1710 = vpop.f32.mrb[0].mxu0
        %1711 = vmatprep.mubr.f32.mxu0 0.0
        %1712 = vmatmul.mubr.f32.gmra.mrb[0].mxu0 %v1596
        %v1713 = vpop.f32.mrb[0].mxu0
        %v1714 = vadd.f32 %v1587, %v1713
        %v1715 = vpop.f32.mrb[0].mxu0
        %1716 = vmatprep.mubr.f32.mxu0 0.0
        %1717 = vmatmul.mubr.f32.gmra.mrb[0].mxu0 %v1599
        %v1718 = vpop.f32.mrb[0].mxu0
        %v1719 = vadd.f32 %v1587, %v1718
        %v1720 = vpop.f32.mrb[0].mxu0
        %1721 = vmatprep.mubr.f32.mxu0 0.0
        %1722 = vmatmul.mubr.f32.gmra.mrb[0].mxu0 %v1602
        %v1723 = vpop.f32.mrb[0].mxu0
        %v1724 = vadd.f32 %v1587, %v1723
        %v1725 = vpop.f32.mrb[0].mxu0
        %1726 = vmatprep.mubr.f32.mxu0 0.0
        %1727 = vmatmul.mubr.f32.gmra.mrb[0].mxu0 %v1605
        %v1728 = vpop.f32.mrb[0].mxu0
        %v1729 = vadd.f32 %v1587, %v1728
        %v1730 = vpop.f32.mrb[0].mxu0
        %1731 = vmatprep.mubr.f32.mxu0 0.0
        %1732 = vmatmul.mubr.f32.gmra.mrb[0].mxu0 %v1608
        %v1733 = vpop.f32.mrb[0].mxu0
        %v1734 = vadd.f32 %v1587, %v1733
        %v1735 = vpop.f32.mrb[0].mxu0
        %1736 = vmatprep.mubr.f32.mxu0 0.0
        %1737 = vmatmul.mubr.f32.gmra.mrb[0].mxu0 %v1611
        %v1738 = vpop.f32.mrb[0].mxu0
        %v1739 = vadd.f32 %v1587, %v1738
        %v1740 = vpop.f32.mrb[0].mxu0
        %1741 = vmatprep.mubr.f32.mxu0 0.0
        %1742 = vmatmul.mubr.f32.gmra.mrb[0].mxu0 %v1614
        %v1743 = vpop.f32.mrb[0].mxu0
        %v1744 = vadd.f32 %v1587, %v1743
        %v1745 = vpop.f32.mrb[0].mxu0
        %1746 = vmatprep.mubr.f32.mxu0 0.0
        %1747 = vmatmul.mubr.f32.gmra.mrb[0].mxu0 %v1617
        %v1748 = vpop.f32.mrb[0].mxu0
        %v1749 = vadd.f32 %v1587, %v1748
        %v1750 = vpop.f32.mrb[0].mxu0
        %1751 = vmatprep.mubr.f32.mxu0 0.0
        %1752 = vmatmul.mubr.f32.gmra.mrb[0].mxu0 %v1620
        %v1753 = vpop.f32.mrb[0].mxu0
        %v1754 = vadd.f32 %v1587, %v1753
        %v1755 = vpop.f32.mrb[0].mxu0
        %1756 = vmatprep.mubr.f32.mxu0 0.0
        %1757 = vmatmul.mubr.f32.gmra.mrb[0].mxu0 %v1623
        %v1758 = vpop.f32.mrb[0].mxu0
        %v1759 = vadd.f32 %v1587, %v1758
        %v1760 = vpop.f32.mrb[0].mxu0
        %1761 = vmatprep.mubr.f32.mxu0 0.0
        %1762 = vmatmul.mubr.f32.gmra.mrb[0].mxu0 %v1626
        %v1763 = vpop.f32.mrb[0].mxu0
        %v1764 = vadd.f32 %v1587, %v1763
        %v1765 = vpop.f32.mrb[0].mxu0
        %1766 = vmatprep.mubr.f32.mxu0 0.0
        %1767 = vmatmul.mubr.f32.gmra.mrb[0].mxu0 %v1629
        %v1768 = vpop.f32.mrb[0].mxu0
        %v1769 = vadd.f32 %v1587, %v1768
        %v1770 = vpop.f32.mrb[0].mxu0
        %1771 = vmatprep.mubr.f32.mxu0 0.0
        %1772 = vmatmul.mubr.f32.gmra.mrb[0].mxu0 %v1632
        %v1773 = vpop.f32.mrb[0].mxu0
        %v1774 = vadd.f32 %v1587, %v1773
        %v1775 = vpop.f32.mrb[0].mxu0
        %1776 = vmatprep.mubr.f32.mxu0 0.0
        %1777 = vmatmul.mubr.f32.gmra.mrb[0].mxu0 %v1635
        %v1778 = vpop.f32.mrb[0].mxu0
        %v1779 = vadd.f32 %v1587, %v1778
        %v1780 = vpop.f32.mrb[0].mxu0
        %1781 = vdwg.mxu0
        %v1782 = vmax.f32 %v1704, 0.0
        %v1783 = vmax.f32 %v1709, 0.0
        %v1784 = vmax.f32 %v1714, 0.0
        %v1785 = vmax.f32 %v1719, 0.0
        %v1786 = vmax.f32 %v1724, 0.0
        %v1787 = vmax.f32 %v1729, 0.0
        %v1788 = vmax.f32 %v1734, 0.0
        %v1789 = vmax.f32 %v1739, 0.0
        %v1790 = vmax.f32 %v1744, 0.0
        %v1791 = vmax.f32 %v1749, 0.0
        %v1792 = vmax.f32 %v1754, 0.0
        %v1793 = vmax.f32 %v1759, 0.0
        %v1794 = vmax.f32 %v1764, 0.0
        %v1795 = vmax.f32 %v1769, 0.0
        %v1796 = vmax.f32 %v1774, 0.0
        %v1797 = vmax.f32 %v1779, 0.0
        %v1798 = vld [vmem:[%s4] sm:$0xff]
        %v1799 = vld [vmem:[%s4 + $0x8] sm:$0xff]
        %v1800 = vld [vmem:[%s4 + $0x10] sm:$0xff]
        %v1801 = vld [vmem:[%s4 + $0x18] sm:$0xff]
        %v1802 = vld [vmem:[%s4 + $0x20] sm:$0xff]
        %v1803 = vld [vmem:[%s4 + $0x28] sm:$0xff]
        %v1804 = vld [vmem:[%s4 + $0x30] sm:$0xff]
        %v1805 = vld [vmem:[%s4 + $0x38] sm:$0xff]
        %v1806 = vld [vmem:[%s4 + $0x40] sm:$0xff]
        %v1807 = vld [vmem:[%s4 + $0x48] sm:$0xff]
        %v1808 = vld [vmem:[%s4 + $0x50] sm:$0xff]
        %v1809 = vld [vmem:[%s4 + $0x58] sm:$0xff]
        %v1810 = vld [vmem:[%s4 + $0x60] sm:$0xff]
        %v1811 = vld [vmem:[%s4 + $0x68] sm:$0xff]
        %v1812 = vld [vmem:[%s4 + $0x70] sm:$0xff]
        %v1813 = vld [vmem:[%s4 + $0x78] sm:$0xff]
        %v1814 = vld [vmem:[%s5] sm:$0x1]
        %v1816 = vlaneseq
        %v1817 = vshrl.u32 %v1816, 7
        %v1818 = vsub.s32 0, %v1817
        %v1819 = vrot.slane %v1814, %v1818
        %1821 = vmatprep.subr.mxu0 0.0
        %1822 = vmatpush1.msra.mxu0 %v1798
        %1823 = vmatprep.subr.mxu0 0.0
        %1824 = vmatpush1.msra.mxu0 %v1799
        %1825 = vmatprep.subr.mxu0 0.0
        %1826 = vmatpush1.msra.mxu0 %v1800
        %1827 = vmatprep.subr.mxu0 0.0
        %1828 = vmatpush1.msra.mxu0 %v1801
        %1829 = vmatprep.subr.mxu0 0.0
        %1830 = vmatpush1.msra.mxu0 %v1802
        %1831 = vmatprep.subr.mxu0 0.0
        %1832 = vmatpush1.msra.mxu0 %v1803
        %1833 = vmatprep.subr.mxu0 0.0
        %1834 = vmatpush1.msra.mxu0 %v1804
        %1835 = vmatprep.subr.mxu0 0.0
        %1836 = vmatpush1.msra.mxu0 %v1805
        %1837 = vmatprep.subr.mxu0 0.0
        %1838 = vmatpush1.msra.mxu0 %v1806
        %1839 = vmatprep.subr.mxu0 0.0
        %1840 = vmatpush1.msra.mxu0 %v1807
        %1841 = vmatprep.subr.mxu0 0.0
        %1842 = vmatpush1.msra.mxu0 %v1808
        %1843 = vmatprep.subr.mxu0 0.0
        %1844 = vmatpush1.msra.mxu0 %v1809
        %1845 = vmatprep.subr.mxu0 0.0
        %1846 = vmatpush1.msra.mxu0 %v1810
        %1847 = vmatprep.subr.mxu0 0.0
        %1848 = vmatpush1.msra.mxu0 %v1811
        %1849 = vmatprep.subr.mxu0 0.0
        %1850 = vmatpush1.msra.mxu0 %v1812
        %1851 = vmatprep.subr.mxu0 0.0
        %1852 = vmatpush1.msra.mxu0 %v1813
        %1853 = vmatprep.subr.mxu0 0.0
        %1854 = vmatpush1.msra.mxu0 0.0
        %1855 = vmatprep.subr.mxu0 0.0
        %1856 = vmatpush1.msra.mxu0 0.0
        %1857 = vmatprep.subr.mxu0 0.0
        %1858 = vmatpush1.msra.mxu0 0.0
        %1859 = vmatprep.subr.mxu0 0.0
        %1860 = vmatpush1.msra.mxu0 0.0
        %1861 = vmatprep.subr.mxu0 0.0
        %1862 = vmatpush1.msra.mxu0 0.0
        %1863 = vmatprep.subr.mxu0 0.0
        %1864 = vmatpush1.msra.mxu0 0.0
        %1865 = vmatprep.subr.mxu0 0.0
        %1866 = vmatpush1.msra.mxu0 0.0
        %1867 = vmatprep.subr.mxu0 0.0
        %1868 = vmatpush1.msra.mxu0 0.0
        %1869 = vmatprep.subr.mxu0 0.0
        %1870 = vmatpush1.msra.mxu0 0.0
        %1871 = vmatprep.subr.mxu0 0.0
        %1872 = vmatpush1.msra.mxu0 0.0
        %1873 = vmatprep.subr.mxu0 0.0
        %1874 = vmatpush1.msra.mxu0 0.0
        %1875 = vmatprep.subr.mxu0 0.0
        %1876 = vmatpush1.msra.mxu0 0.0
        %1877 = vmatprep.subr.mxu0 0.0
        %1878 = vmatpush1.msra.mxu0 0.0
        %1879 = vmatprep.subr.mxu0 0.0
        %1880 = vmatpush1.msra.mxu0 0.0
        %1881 = vmatprep.subr.mxu0 0.0
        %1882 = vmatpush1.msra.mxu0 0.0
        %1883 = vmatprep.subr.mxu0 0.0
        %1884 = vmatpush1.msra.mxu0 0.0
        %1885 = vmatprep.mubr.f32.mxu0 0.0
        %1886 = vmatmul.mubr.f32.gmra.mrb[0].mxu0 %v1782
        %v1887 = vpop.f32.mrb[0].mxu0
        %v1888 = vadd.f32 %v1819, %v1887
        %v1889 = vpop.f32.mrb[0].mxu0
        %1890 = vmatprep.mubr.f32.mxu0 0.0
        %1891 = vmatmul.mubr.f32.gmra.mrb[0].mxu0 %v1783
        %v1892 = vpop.f32.mrb[0].mxu0
        %v1893 = vadd.f32 %v1819, %v1892
        %v1894 = vpop.f32.mrb[0].mxu0
        %1895 = vmatprep.mubr.f32.mxu0 0.0
        %1896 = vmatmul.mubr.f32.gmra.mrb[0].mxu0 %v1784
        %v1897 = vpop.f32.mrb[0].mxu0
        %v1898 = vadd.f32 %v1819, %v1897
        %v1899 = vpop.f32.mrb[0].mxu0
        %1900 = vmatprep.mubr.f32.mxu0 0.0
        %1901 = vmatmul.mubr.f32.gmra.mrb[0].mxu0 %v1785
        %v1902 = vpop.f32.mrb[0].mxu0
        %v1903 = vadd.f32 %v1819, %v1902
        %v1904 = vpop.f32.mrb[0].mxu0
        %1905 = vmatprep.mubr.f32.mxu0 0.0
        %1906 = vmatmul.mubr.f32.gmra.mrb[0].mxu0 %v1786
        %v1907 = vpop.f32.mrb[0].mxu0
        %v1908 = vadd.f32 %v1819, %v1907
        %v1909 = vpop.f32.mrb[0].mxu0
        %1910 = vmatprep.mubr.f32.mxu0 0.0
        %1911 = vmatmul.mubr.f32.gmra.mrb[0].mxu0 %v1787
        %v1912 = vpop.f32.mrb[0].mxu0
        %v1913 = vadd.f32 %v1819, %v1912
        %v1914 = vpop.f32.mrb[0].mxu0
        %1915 = vmatprep.mubr.f32.mxu0 0.0
        %1916 = vmatmul.mubr.f32.gmra.mrb[0].mxu0 %v1788
        %v1917 = vpop.f32.mrb[0].mxu0
        %v1918 = vadd.f32 %v1819, %v1917
        %v1919 = vpop.f32.mrb[0].mxu0
        %1920 = vmatprep.mubr.f32.mxu0 0.0
        %1921 = vmatmul.mubr.f32.gmra.mrb[0].mxu0 %v1789
        %v1922 = vpop.f32.mrb[0].mxu0
        %v1923 = vadd.f32 %v1819, %v1922
        %v1924 = vpop.f32.mrb[0].mxu0
        %1925 = vmatprep.mubr.f32.mxu0 0.0
        %1926 = vmatmul.mubr.f32.gmra.mrb[0].mxu0 %v1790
        %v1927 = vpop.f32.mrb[0].mxu0
        %v1928 = vadd.f32 %v1819, %v1927
        %v1929 = vpop.f32.mrb[0].mxu0
        %1930 = vmatprep.mubr.f32.mxu0 0.0
        %1931 = vmatmul.mubr.f32.gmra.mrb[0].mxu0 %v1791
        %v1932 = vpop.f32.mrb[0].mxu0
        %v1933 = vadd.f32 %v1819, %v1932
        %v1934 = vpop.f32.mrb[0].mxu0
        %1935 = vmatprep.mubr.f32.mxu0 0.0
        %1936 = vmatmul.mubr.f32.gmra.mrb[0].mxu0 %v1792
        %v1937 = vpop.f32.mrb[0].mxu0
        %v1938 = vadd.f32 %v1819, %v1937
        %v1939 = vpop.f32.mrb[0].mxu0
        %1940 = vmatprep.mubr.f32.mxu0 0.0
        %1941 = vmatmul.mubr.f32.gmra.mrb[0].mxu0 %v1793
        %v1942 = vpop.f32.mrb[0].mxu0
        %v1943 = vadd.f32 %v1819, %v1942
        %v1944 = vpop.f32.mrb[0].mxu0
        %1945 = vmatprep.mubr.f32.mxu0 0.0
        %1946 = vmatmul.mubr.f32.gmra.mrb[0].mxu0 %v1794
        %v1947 = vpop.f32.mrb[0].mxu0
        %v1948 = vadd.f32 %v1819, %v1947
        %v1949 = vpop.f32.mrb[0].mxu0
        %1950 = vmatprep.mubr.f32.mxu0 0.0
        %1951 = vmatmul.mubr.f32.gmra.mrb[0].mxu0 %v1795
        %v1952 = vpop.f32.mrb[0].mxu0
        %v1953 = vadd.f32 %v1819, %v1952
        %v1954 = vpop.f32.mrb[0].mxu0
        %1955 = vmatprep.mubr.f32.mxu0 0.0
        %1956 = vmatmul.mubr.f32.gmra.mrb[0].mxu0 %v1796
        %v1957 = vpop.f32.mrb[0].mxu0
        %v1958 = vadd.f32 %v1819, %v1957
        %v1959 = vpop.f32.mrb[0].mxu0
        %1960 = vmatprep.mubr.f32.mxu0 0.0
        %1961 = vmatmul.mubr.f32.gmra.mrb[0].mxu0 %v1797
        %v1962 = vpop.f32.mrb[0].mxu0
        %v1963 = vadd.f32 %v1819, %v1962
        %v1964 = vpop.f32.mrb[0].mxu0
        %1965 = vdwg.mxu0
        %v1966 = vadd.f32 %v1888, %v1562
        %v1967 = vadd.f32 %v1893, %v1563
        %v1968 = vadd.f32 %v1898, %v1564
        %v1969 = vadd.f32 %v1903, %v1565
        %v1970 = vadd.f32 %v1908, %v1566
        %v1971 = vadd.f32 %v1913, %v1567
        %v1972 = vadd.f32 %v1918, %v1568
        %v1973 = vadd.f32 %v1923, %v1569
        %v1974 = vadd.f32 %v1928, %v1570
        %v1975 = vadd.f32 %v1933, %v1571
        %v1976 = vadd.f32 %v1938, %v1572
        %v1977 = vadd.f32 %v1943, %v1573
        %v1978 = vadd.f32 %v1948, %v1574
        %v1979 = vadd.f32 %v1953, %v1575
        %v1980 = vadd.f32 %v1958, %v1576
        %v1981 = vadd.f32 %v1963, %v1577
        %v1982 = vmul.f32 %v1966, %v1405
        %v1983 = vmul.f32 %v1967, %v1410
        %v1984 = vmul.f32 %v1968, %v1415
        %v1985 = vmul.f32 %v1969, %v1420
        %v1986 = vmul.f32 %v1970, %v1425
        %v1987 = vmul.f32 %v1971, %v1430
        %v1988 = vmul.f32 %v1972, %v1435
        %v1989 = vmul.f32 %v1973, %v1440
        %v1990 = vmul.f32 %v1974, %v1445
        %v1991 = vmul.f32 %v1975, %v1450
        %v1992 = vmul.f32 %v1976, %v1455
        %v1993 = vmul.f32 %v1977, %v1460
        %v1994 = vmul.f32 %v1978, %v1465
        %v1995 = vmul.f32 %v1979, %v1470
        %v1996 = vmul.f32 %v1980, %v1475
        %v1997 = vmul.f32 %v1981, %v1480
        %v1998 = vadd.f32 %v1982, %v1500
        %v1999 = vadd.f32 %v1983, %v1504
        %v2000 = vadd.f32 %v1984, %v1508
        %v2001 = vadd.f32 %v1985, %v1512
        %v2002 = vadd.f32 %v1986, %v1516
        %v2003 = vadd.f32 %v1987, %v1520
        %v2004 = vadd.f32 %v1988, %v1524
        %v2005 = vadd.f32 %v1989, %v1528
        %v2006 = vadd.f32 %v1990, %v1532
        %v2007 = vadd.f32 %v1991, %v1536
        %v2008 = vadd.f32 %v1992, %v1540
        %v2009 = vadd.f32 %v1993, %v1544
        %v2010 = vadd.f32 %v1994, %v1548
        %v2011 = vadd.f32 %v1995, %v1552
        %v2012 = vadd.f32 %v1996, %v1556
        %v2013 = vadd.f32 %v1997, %v1560
        %v2014 = vmax.f32 %v1998, 0.0
        %v2015 = vmax.f32 %v1999, 0.0
        %v2016 = vmax.f32 %v2000, 0.0
        %v2017 = vmax.f32 %v2001, 0.0
        %v2018 = vmax.f32 %v2002, 0.0
        %v2019 = vmax.f32 %v2003, 0.0
        %v2020 = vmax.f32 %v2004, 0.0
        %v2021 = vmax.f32 %v2005, 0.0
        %v2022 = vmax.f32 %v2006, 0.0
        %v2023 = vmax.f32 %v2007, 0.0
        %v2024 = vmax.f32 %v2008, 0.0
        %v2025 = vmax.f32 %v2009, 0.0
        %v2026 = vmax.f32 %v2010, 0.0
        %v2027 = vmax.f32 %v2011, 0.0
        %v2028 = vmax.f32 %v2012, 0.0
        %v2029 = vmax.f32 %v2013, 0.0
        %v2030 = vld [vmem:[%s7] sm:$0xff]
        %v2031 = vld [vmem:[%s7 + $0x8] sm:$0xff]
        %v2032 = vld [vmem:[%s7 + $0x10] sm:$0xff]
        %v2033 = vld [vmem:[%s7 + $0x18] sm:$0xff]
        %v2035 = vsel %vm327, %v2014, 0
        %v2038 = vsel %vm327, %v2015, 0
        %v2041 = vsel %vm327, %v2016, 0
        %v2044 = vsel %vm327, %v2017, 0
        %v2047 = vsel %vm327, %v2018, 0
        %v2050 = vsel %vm327, %v2019, 0
        %v2053 = vsel %vm327, %v2020, 0
        %v2056 = vsel %vm327, %v2021, 0
        %v2059 = vsel %vm327, %v2022, 0
        %v2062 = vsel %vm327, %v2023, 0
        %v2065 = vsel %vm327, %v2024, 0
        %v2068 = vsel %vm327, %v2025, 0
        %v2071 = vsel %vm327, %v2026, 0
        %v2074 = vsel %vm327, %v2027, 0
        %v2077 = vsel %vm327, %v2028, 0
        %v2080 = vsel %vm327, %v2029, 0
        %2082 = vmatprep.subr.mxu0 0.0
        %2083 = vmatpush1.msra.mxu0 %v2030
        %2084 = vmatprep.subr.mxu0 0.0
        %2085 = vmatpush1.msra.mxu0 %v2031
        %2086 = vmatprep.subr.mxu0 0.0
        %2087 = vmatpush1.msra.mxu0 %v2032
        %2088 = vmatprep.subr.mxu0 0.0
        %2089 = vmatpush1.msra.mxu0 %v2033
        %2090 = vmatprep.subr.mxu0 0.0
        %2091 = vmatpush1.msra.mxu0 0.0
        %2092 = vmatprep.subr.mxu0 0.0
        %2093 = vmatpush1.msra.mxu0 0.0
        %2094 = vmatprep.subr.mxu0 0.0
        %2095 = vmatpush1.msra.mxu0 0.0
        %2096 = vmatprep.subr.mxu0 0.0
        %2097 = vmatpush1.msra.mxu0 0.0
        %2098 = vmatprep.subr.mxu0 0.0
        %2099 = vmatpush1.msra.mxu0 0.0
        %2100 = vmatprep.subr.mxu0 0.0
        %2101 = vmatpush1.msra.mxu0 0.0
        %2102 = vmatprep.subr.mxu0 0.0
        %2103 = vmatpush1.msra.mxu0 0.0
        %2104 = vmatprep.subr.mxu0 0.0
        %2105 = vmatpush1.msra.mxu0 0.0
        %2106 = vmatprep.subr.mxu0 0.0
        %2107 = vmatpush1.msra.mxu0 0.0
        %2108 = vmatprep.subr.mxu0 0.0
        %2109 = vmatpush1.msra.mxu0 0.0
        %2110 = vmatprep.subr.mxu0 0.0
        %2111 = vmatpush1.msra.mxu0 0.0
        %2112 = vmatprep.subr.mxu0 0.0
        %2113 = vmatpush1.msra.mxu0 0.0
        %2114 = vmatprep.subr.mxu0 0.0
        %2115 = vmatpush1.msra.mxu0 0.0
        %2116 = vmatprep.subr.mxu0 0.0
        %2117 = vmatpush1.msra.mxu0 0.0
        %2118 = vmatprep.subr.mxu0 0.0
        %2119 = vmatpush1.msra.mxu0 0.0
        %2120 = vmatprep.subr.mxu0 0.0
        %2121 = vmatpush1.msra.mxu0 0.0
        %2122 = vmatprep.subr.mxu0 0.0
        %2123 = vmatpush1.msra.mxu0 0.0
        %2124 = vmatprep.subr.mxu0 0.0
        %2125 = vmatpush1.msra.mxu0 0.0
        %2126 = vmatprep.subr.mxu0 0.0
        %2127 = vmatpush1.msra.mxu0 0.0
        %2128 = vmatprep.subr.mxu0 0.0
        %2129 = vmatpush1.msra.mxu0 0.0
        %2130 = vmatprep.subr.mxu0 0.0
        %2131 = vmatpush1.msra.mxu0 0.0
        %2132 = vmatprep.subr.mxu0 0.0
        %2133 = vmatpush1.msra.mxu0 0.0
        %2134 = vmatprep.subr.mxu0 0.0
        %2135 = vmatpush1.msra.mxu0 0.0
        %2136 = vmatprep.subr.mxu0 0.0
        %2137 = vmatpush1.msra.mxu0 0.0
        %2138 = vmatprep.subr.mxu0 0.0
        %2139 = vmatpush1.msra.mxu0 0.0
        %2140 = vmatprep.subr.mxu0 0.0
        %2141 = vmatpush1.msra.mxu0 0.0
        %2142 = vmatprep.subr.mxu0 0.0
        %2143 = vmatpush1.msra.mxu0 0.0
        %2144 = vmatprep.subr.mxu0 0.0
        %2145 = vmatpush1.msra.mxu0 0.0
        %2146 = vmatprep.mubr.f32.mxu0 0.0
        %2147 = vmatmul.mubr.f32.gmra.mrb[0].mxu0 %v2035
        %v2148 = vpop.f32.mrb[0].mxu0
        %v2149 = vadd.f32 0.0, %v2148
        %v2150 = vpop.f32.mrb[0].mxu0
        %2151 = vmatprep.mubr.f32.mxu0 0.0
        %2152 = vmatmul.mubr.f32.gmra.mrb[0].mxu0 %v2038
        %v2153 = vpop.f32.mrb[0].mxu0
        %v2154 = vadd.f32 0.0, %v2153
        %v2155 = vpop.f32.mrb[0].mxu0
        %2156 = vmatprep.mubr.f32.mxu0 0.0
        %2157 = vmatmul.mubr.f32.gmra.mrb[0].mxu0 %v2041
        %v2158 = vpop.f32.mrb[0].mxu0
        %v2159 = vadd.f32 0.0, %v2158
        %v2160 = vpop.f32.mrb[0].mxu0
        %2161 = vmatprep.mubr.f32.mxu0 0.0
        %2162 = vmatmul.mubr.f32.gmra.mrb[0].mxu0 %v2044
        %v2163 = vpop.f32.mrb[0].mxu0
        %v2164 = vadd.f32 0.0, %v2163
        %v2165 = vpop.f32.mrb[0].mxu0
        %2166 = vmatprep.mubr.f32.mxu0 0.0
        %2167 = vmatmul.mubr.f32.gmra.mrb[0].mxu0 %v2047
        %v2168 = vpop.f32.mrb[0].mxu0
        %v2169 = vadd.f32 0.0, %v2168
        %v2170 = vpop.f32.mrb[0].mxu0
        %2171 = vmatprep.mubr.f32.mxu0 0.0
        %2172 = vmatmul.mubr.f32.gmra.mrb[0].mxu0 %v2050
        %v2173 = vpop.f32.mrb[0].mxu0
        %v2174 = vadd.f32 0.0, %v2173
        %v2175 = vpop.f32.mrb[0].mxu0
        %2176 = vmatprep.mubr.f32.mxu0 0.0
        %2177 = vmatmul.mubr.f32.gmra.mrb[0].mxu0 %v2053
        %v2178 = vpop.f32.mrb[0].mxu0
        %v2179 = vadd.f32 0.0, %v2178
        %v2180 = vpop.f32.mrb[0].mxu0
        %2181 = vmatprep.mubr.f32.mxu0 0.0
        %2182 = vmatmul.mubr.f32.gmra.mrb[0].mxu0 %v2056
        %v2183 = vpop.f32.mrb[0].mxu0
        %v2184 = vadd.f32 0.0, %v2183
        %v2185 = vpop.f32.mrb[0].mxu0
        %2186 = vmatprep.mubr.f32.mxu0 0.0
        %2187 = vmatmul.mubr.f32.gmra.mrb[0].mxu0 %v2059
        %v2188 = vpop.f32.mrb[0].mxu0
        %v2189 = vadd.f32 0.0, %v2188
        %v2190 = vpop.f32.mrb[0].mxu0
        %2191 = vmatprep.mubr.f32.mxu0 0.0
        %2192 = vmatmul.mubr.f32.gmra.mrb[0].mxu0 %v2062
        %v2193 = vpop.f32.mrb[0].mxu0
        %v2194 = vadd.f32 0.0, %v2193
        %v2195 = vpop.f32.mrb[0].mxu0
        %2196 = vmatprep.mubr.f32.mxu0 0.0
        %2197 = vmatmul.mubr.f32.gmra.mrb[0].mxu0 %v2065
        %v2198 = vpop.f32.mrb[0].mxu0
        %v2199 = vadd.f32 0.0, %v2198
        %v2200 = vpop.f32.mrb[0].mxu0
        %2201 = vmatprep.mubr.f32.mxu0 0.0
        %2202 = vmatmul.mubr.f32.gmra.mrb[0].mxu0 %v2068
        %v2203 = vpop.f32.mrb[0].mxu0
        %v2204 = vadd.f32 0.0, %v2203
        %v2205 = vpop.f32.mrb[0].mxu0
        %2206 = vmatprep.mubr.f32.mxu0 0.0
        %2207 = vmatmul.mubr.f32.gmra.mrb[0].mxu0 %v2071
        %v2208 = vpop.f32.mrb[0].mxu0
        %v2209 = vadd.f32 0.0, %v2208
        %v2210 = vpop.f32.mrb[0].mxu0
        %2211 = vmatprep.mubr.f32.mxu0 0.0
        %2212 = vmatmul.mubr.f32.gmra.mrb[0].mxu0 %v2074
        %v2213 = vpop.f32.mrb[0].mxu0
        %v2214 = vadd.f32 0.0, %v2213
        %v2215 = vpop.f32.mrb[0].mxu0
        %2216 = vmatprep.mubr.f32.mxu0 0.0
        %2217 = vmatmul.mubr.f32.gmra.mrb[0].mxu0 %v2077
        %v2218 = vpop.f32.mrb[0].mxu0
        %v2219 = vadd.f32 0.0, %v2218
        %v2220 = vpop.f32.mrb[0].mxu0
        %2221 = vmatprep.mubr.f32.mxu0 0.0
        %2222 = vmatmul.mubr.f32.gmra.mrb[0].mxu0 %v2080
        %v2223 = vpop.f32.mrb[0].mxu0
        %v2224 = vadd.f32 0.0, %v2223
        %v2225 = vpop.f32.mrb[0].mxu0
        %2226 = vdwg.mxu0
        %2243 = vrot.lane.b32.xlu0 %v2149, 112
        %v2244 = vpop.permute.xlu0 %2243
        %2245 = vrot.lane.b32.xlu0 %v2154, 112
        %v2246 = vpop.permute.xlu0 %2245
        %2247 = vrot.lane.b32.xlu0 %v2159, 112
        %v2248 = vpop.permute.xlu0 %2247
        %2249 = vrot.lane.b32.xlu0 %v2164, 112
        %v2250 = vpop.permute.xlu0 %2249
        %2251 = vrot.lane.b32.xlu0 %v2169, 112
        %v2252 = vpop.permute.xlu0 %2251
        %2253 = vrot.lane.b32.xlu0 %v2174, 112
        %v2254 = vpop.permute.xlu0 %2253
        %2255 = vrot.lane.b32.xlu0 %v2179, 112
        %v2256 = vpop.permute.xlu0 %2255
        %2257 = vrot.lane.b32.xlu0 %v2184, 112
        %v2258 = vpop.permute.xlu0 %2257
        %2259 = vrot.lane.b32.xlu0 %v2189, 112
        %v2260 = vpop.permute.xlu0 %2259
        %2261 = vrot.lane.b32.xlu0 %v2194, 112
        %v2262 = vpop.permute.xlu0 %2261
        %2263 = vrot.lane.b32.xlu0 %v2199, 112
        %v2264 = vpop.permute.xlu0 %2263
        %2265 = vrot.lane.b32.xlu0 %v2204, 112
        %v2266 = vpop.permute.xlu0 %2265
        %2267 = vrot.lane.b32.xlu0 %v2209, 112
        %v2268 = vpop.permute.xlu0 %2267
        %2269 = vrot.lane.b32.xlu0 %v2214, 112
        %v2270 = vpop.permute.xlu0 %2269
        %2271 = vrot.lane.b32.xlu0 %v2219, 112
        %v2272 = vpop.permute.xlu0 %2271
        %2273 = vrot.lane.b32.xlu0 %v2224, 112
        %v2274 = vpop.permute.xlu0 %2273
        %v2291 = vmax.f32 %v2149, %v2244
        %v2292 = vmax.f32 %v2154, %v2246
        %v2293 = vmax.f32 %v2159, %v2248
        %v2294 = vmax.f32 %v2164, %v2250
        %v2295 = vmax.f32 %v2169, %v2252
        %v2296 = vmax.f32 %v2174, %v2254
        %v2297 = vmax.f32 %v2179, %v2256
        %v2298 = vmax.f32 %v2184, %v2258
        %v2299 = vmax.f32 %v2189, %v2260
        %v2300 = vmax.f32 %v2194, %v2262
        %v2301 = vmax.f32 %v2199, %v2264
        %v2302 = vmax.f32 %v2204, %v2266
        %v2303 = vmax.f32 %v2209, %v2268
        %v2304 = vmax.f32 %v2214, %v2270
        %v2305 = vmax.f32 %v2219, %v2272
        %v2306 = vmax.f32 %v2224, %v2274
        %vm2307 = vcmask 130048
        %2308 = vst.msk [vmem:[%s299] sm:$0xff] %vm2307, %v2291
        %2309 = vst.msk [vmem:[%s299 + $0x8] sm:$0xff] %vm2307, %v2292
        %2312 = vrot.lane.b32.xlu0 %v2293, 16
        %v2313 = vpop.permute.xlu0 %2312
        %2314 = vrot.lane.b32.xlu0 %v2294, 16
        %v2315 = vpop.permute.xlu0 %2314
        %vm2318 = vcmask 261248
        %2319 = vst.msk [vmem:[%s299] sm:$0xff] %vm2318, %v2313
        %2320 = vst.msk [vmem:[%s299 + $0x8] sm:$0xff] %vm2318, %v2315
        %2323 = vrot.lane.b32.xlu0 %v2295, 32
        %v2324 = vpop.permute.xlu0 %2323
        %2325 = vrot.lane.b32.xlu0 %v2296, 32
        %v2326 = vpop.permute.xlu0 %2325
        %vm2329 = vcmask 392448
        %2330 = vst.msk [vmem:[%s299] sm:$0xff] %vm2329, %v2324
        %2331 = vst.msk [vmem:[%s299 + $0x8] sm:$0xff] %vm2329, %v2326
        %2334 = vrot.lane.b32.xlu0 %v2297, 48
        %v2335 = vpop.permute.xlu0 %2334
        %2336 = vrot.lane.b32.xlu0 %v2298, 48
        %v2337 = vpop.permute.xlu0 %2336
        %vm2340 = vcmask 523648
        %2341 = vst.msk [vmem:[%s299] sm:$0xff] %vm2340, %v2335
        %2342 = vst.msk [vmem:[%s299 + $0x8] sm:$0xff] %vm2340, %v2337
        %2345 = vrot.lane.b32.xlu0 %v2299, 64
        %v2346 = vpop.permute.xlu0 %2345
        %2347 = vrot.lane.b32.xlu0 %v2300, 64
        %v2348 = vpop.permute.xlu0 %2347
        %vm2351 = vcmask 654848
        %2352 = vst.msk [vmem:[%s299] sm:$0xff] %vm2351, %v2346
        %2353 = vst.msk [vmem:[%s299 + $0x8] sm:$0xff] %vm2351, %v2348
        %2356 = vrot.lane.b32.xlu0 %v2301, 80
        %v2357 = vpop.permute.xlu0 %2356
        %2358 = vrot.lane.b32.xlu0 %v2302, 80
        %v2359 = vpop.permute.xlu0 %2358
        %vm2362 = vcmask 786048
        %2363 = vst.msk [vmem:[%s299] sm:$0xff] %vm2362, %v2357
        %2364 = vst.msk [vmem:[%s299 + $0x8] sm:$0xff] %vm2362, %v2359
        %2367 = vrot.lane.b32.xlu0 %v2303, 96
        %v2368 = vpop.permute.xlu0 %2367
        %2369 = vrot.lane.b32.xlu0 %v2304, 96
        %v2370 = vpop.permute.xlu0 %2369
        %vm2373 = vcmask 917248
        %2374 = vst.msk [vmem:[%s299] sm:$0xff] %vm2373, %v2368
        %2375 = vst.msk [vmem:[%s299 + $0x8] sm:$0xff] %vm2373, %v2370
        %2378 = vrot.lane.b32.xlu0 %v2305, 112
        %v2379 = vpop.permute.xlu0 %2378
        %2380 = vrot.lane.b32.xlu0 %v2306, 112
        %v2381 = vpop.permute.xlu0 %2380
        %vm2384 = vcmask 1048448
        %2385 = vst.msk [vmem:[%s299] sm:$0xff] %vm2384, %v2379
        %2386 = vst.msk [vmem:[%s299 + $0x8] sm:$0xff] %vm2384, %v2381
        %s2387 = sand.u32 %s203, 1
        %s2388 = scalar_lea.sflag [#allocation3], %s2387
        %s2389 = sand.u32 %s203, 1
        %s2390 = smul.addr %s2389, 16
        %s2391 = scalar_lea.vmem [#allocation2], %s2390
        // Predicated region
        $region53: #{tpu_custom_call.1} parent=51 // pred_check
          %p2392 = pneg %p213
        $region54: #{tpu_custom_call.1} parent=51 // pred_check_branch
          %2394 = sbr.rel (%p2392) target = $region56
        $region55: #{tpu_custom_call.1} parent=51 // pred_region
          %s2395 = smul.u32 2, %s22
          %s2397 = ssub.s32 256, 256
          %2398 = vsyncadd %s2388, %s2397
          %s2399 = smul.addr %s2395, 128
          %s2400 = scalar_lea.hbm %s8, %s2399
          %s2401 = sshll.u32 %s2391, 4
          %s2402 = int_to_ptr.vmem [resolvable:$true] %s2401
          %2407 = dma.vmem_to_hbm [thread:$0]  %s2402, 256, %s2400, %s2388, 128, 128, 8
        $region56: #{tpu_custom_call.1} parent=51 // pred_fallthru
          _
      $region52: #{tpu_custom_call.1} parent=5 // pred_fallthru
        _
      %p2408 = scmp.le.s32.totalorder 2, %s17
      // Predicated region
      $region57: #{tpu_custom_call.1} parent=5 // pred_check
        %p2409 = pneg %p2408
      $region58: #{tpu_custom_call.1} parent=5 // pred_check_branch
        %2411 = sbr.rel (%p2409) target = $region60
      $region59: #{tpu_custom_call.1} parent=5 // pred_region
        %s2412 = ssub.s32 %s17, 2
        // Predicated region
        $region61: #{tpu_custom_call.1} parent=59 // pred_check
          %p2413 = pneg %p219
        $region62: #{tpu_custom_call.1} parent=59 // pred_check_branch
          %2415 = sbr.rel (%p2413) target = $region64
        $region63: #{tpu_custom_call.1} parent=59 // pred_region
          %s2416 = sand.u32 %s204, 1
          %s2417 = scalar_lea.sflag [#allocation3], %s2416
          %s2418 = sand.u32 %s204, 1
          %s2419 = smul.addr %s2418, 16
          %s2420 = scalar_lea.vmem [#allocation2], %s2419
          %2421 = dma.done %s2417, 256
        $region64: #{tpu_custom_call.1} parent=59 // pred_fallthru
          _
      $region60: #{tpu_custom_call.1} parent=5 // pred_fallthru
        _
    $region6: #{tpu_custom_call.1} parent=1 // loop_footer
      %s21 = sadd.s32 1, %s17
    $region7: #{tpu_custom_call.1} parent=1 // loop_footer_branch
      %16 = sbr.rel target = $region3
    $region8: #{tpu_custom_call.1} parent=1 // loop_exit
      _
    %2422 = vsyncpa [#allocation3], 1
    %s2423 = scalar_lea.sflag [#allocation3], 1
    %2424 = vsyncpa %s2423, 1

</llo_original>
